<compile_context>
chip_gen: v6e
topology: v6e:2x2x1
jax: 0.10.0
libtpu: 0.0.40
codegen_flags: <defaults>
</compile_context>

<pallas_src>
import functools

import jax
import jax.numpy as jnp
from jax.experimental import pallas as pl
from jax.experimental.pallas import tpu as pltpu


# -----------------------------------------------------------------------------
# helpers
# -----------------------------------------------------------------------------
def _round_up(x, m):
    return (x + m - 1) // m * m


def _pad_to(arr, shape):
    pads = [(0, t - s) for s, t in zip(arr.shape, shape)]
    return jnp.pad(arr, pads)


# -----------------------------------------------------------------------------
# Pallas kernel: one (ensemble member, batch tile) -> mean / var tile.
# Refs are 2-D (ensemble dim squeezed). Matmul inputs are bf16, accumulation
# and all elementwise math (Swish, softplus clamp, exp) are f32.
# -----------------------------------------------------------------------------
def _ensemble_kernel(x_ref,
                     w1_ref, b1_ref, w2_ref, b2_ref,
                     w3_ref, b3_ref, w4_ref, b4_ref,
                     w5m_ref, b5m_ref, w5v_ref, b5v_ref,
                     maxlv_ref, minlv_ref,
                     mean_ref, var_ref,
                     *, ret_log_var):
    h = x_ref[...]  # bf16 (TM, Din_p)

    def fc_swish(h_bf16, w_ref, b_ref):
        y = jnp.dot(h_bf16, w_ref[...],
                    preferred_element_type=jnp.float32) + b_ref[...]
        y = y * jax.nn.sigmoid(y)          # Swish in f32 (VPU/EUP)
        return y.astype(jnp.bfloat16)      # cast only to feed the next MXU dot

    h = fc_swish(h, w1_ref, b1_ref)
    h = fc_swish(h, w2_ref, b2_ref)
    h = fc_swish(h, w3_ref, b3_ref)
    h = fc_swish(h, w4_ref, b4_ref)

    # Two lane-aligned output dots instead of slicing a fused y5.
    mean = jnp.dot(h, w5m_ref[...],
                   preferred_element_type=jnp.float32) + b5m_ref[...]
    raw_lv = jnp.dot(h, w5v_ref[...],
                     preferred_element_type=jnp.float32) + b5v_ref[...]

    max_lv = maxlv_ref[...]  # (1, out_p) -> broadcasts over batch rows
    min_lv = minlv_ref[...]
    logvar = max_lv - jax.nn.softplus(max_lv - raw_lv)
    logvar = min_lv + jax.nn.softplus(logvar - min_lv)

    mean_ref[...] = mean.astype(mean_ref.dtype)
    if ret_log_var:
        var_ref[...] = logvar.astype(var_ref.dtype)
    else:
        var_ref[...] = jnp.exp(logvar).astype(var_ref.dtype)


# -----------------------------------------------------------------------------
# Wrapper: padding, bf16 casts, BlockSpecs, grid, and un-padding.
# -----------------------------------------------------------------------------
def ensemble_model_forward(x, params, ret_log_var=False, block_n=256):
    """x: (ensemble, N, state+action) f32. Returns (mean, var_or_logvar) f32."""
    E, N, d_in = x.shape
    H = params["w1"].shape[-1]
    output_dim = params["max_logvar"].shape[-1]

    # Lane-aligned padded dims.
    d_in_p = _round_up(d_in, 128)
    H_p = _round_up(H, 128)
    out_p = _round_up(output_dim, 128)

    # Batch tile: multiple of 8 sublanes, bounded by block_n; pad N to a
    # multiple of TM so the grid divides evenly.
    TM = min(block_n, _round_up(N, 8))
    N_p = _round_up(N, TM)
    n_tiles = N_p // TM

    bf16 = jnp.bfloat16
    f32 = jnp.float32

    # ---- pad + cast inputs / params (zero padding => padded lanes inert) ----
    x_p = _pad_to(x, (E, N_p, d_in_p)).astype(bf16)

    def pad_w(w, di_p, do_p):
        return _pad_to(w, (E, di_p, do_p)).astype(bf16)

    def pad_b(b, do_p):
        return _pad_to(b.reshape(E, 1, -1), (E, 1, do_p)).astype(f32)

    w1 = pad_w(params["w1"], d_in_p, H_p)
    w2 = pad_w(params["w2"], H_p, H_p)
    w3 = pad_w(params["w3"], H_p, H_p)
    w4 = pad_w(params["w4"], H_p, H_p)
    b1 = pad_b(params["b1"], H_p)
    b2 = pad_b(params["b2"], H_p)
    b3 = pad_b(params["b3"], H_p)
    b4 = pad_b(params["b4"], H_p)

    # Split the last layer into mean / logvar halves (lane-aligned dots).
    w5 = params["w5"]
    b5 = params["b5"]
    w5m = pad_w(w5[:, :, :output_dim], H_p, out_p)
    w5v = pad_w(w5[:, :, output_dim:], H_p, out_p)
    b5m = pad_b(b5[:, :output_dim], out_p)
    b5v = pad_b(b5[:, output_dim:], out_p)

    max_lv = _pad_to(params["max_logvar"], (1, out_p)).astype(f32)
    min_lv = _pad_to(params["min_logvar"], (1, out_p)).astype(f32)

    # ---- BlockSpecs ----------------------------------------------------------
    # x / outputs: one (TM, D) tile per (e, n); ensemble dim squeezed.
    x_spec = pl.BlockSpec((None, TM, d_in_p), lambda e, n: (e, n, 0))

    def w_spec(arr):
        # weight block index ignores the batch axis -> stays resident in VMEM
        # across the inner batch-tile loop.
        return pl.BlockSpec((None, arr.shape[1], arr.shape[2]),
                            lambda e, n: (e, 0, 0))

    def b_spec(arr):
        return pl.BlockSpec((None, 1, arr.shape[2]), lambda e, n: (e, 0, 0))

    lv_spec = pl.BlockSpec((1, out_p), lambda e, n: (0, 0))

    in_specs = [x_spec,
                w_spec(w1), b_spec(b1), w_spec(w2), b_spec(b2),
                w_spec(w3), b_spec(b3), w_spec(w4), b_spec(b4),
                w_spec(w5m), b_spec(b5m), w_spec(w5v), b_spec(b5v),
                lv_spec, lv_spec]

    out_spec = pl.BlockSpec((None, TM, out_p), lambda e, n: (e, n, 0))
    out_shape = (jax.ShapeDtypeStruct((E, N_p, out_p), f32),
                 jax.ShapeDtypeStruct((E, N_p, out_p), f32))

    # ---- cost estimate (advisory) -------------------------------------------
    flops = 2 * E * N_p * (d_in_p * H_p + 3 * H_p * H_p + 2 * H_p * out_p)
    transcendentals = E * N_p * (4 * H_p + 3 * out_p)
    weight_bytes = sum(a.size * a.dtype.itemsize
                       for a in (w1, w2, w3, w4, w5m, w5v,
                                 b1, b2, b3, b4, b5m, b5v, max_lv, min_lv))
    bytes_accessed = (x_p.size * 2 + weight_bytes + 2 * E * N_p * out_p * 4)

    kernel = functools.partial(_ensemble_kernel, ret_log_var=ret_log_var)

    mean_p, var_p = pl.pallas_call(
        kernel,
        grid=(E, n_tiles),
        in_specs=in_specs,
        out_specs=(out_spec, out_spec),
        out_shape=out_shape,
        compiler_params=pltpu.CompilerParams(
            dimension_semantics=("parallel", "parallel"),
            vmem_limit_bytes=32 * 1024 * 1024),
        cost_estimate=pl.CostEstimate(flops=flops,
                                      transcendentals=transcendentals,
                                      bytes_accessed=bytes_accessed),
    )(x_p, w1, b1, w2, b2, w3, b3, w4, b4, w5m, b5m, w5v, b5v, max_lv, min_lv)

    # Un-pad in the wrapper (free layout plumbing).
    return mean_p[:, :N, :output_dim], var_p[:, :N, :output_dim]


# -----------------------------------------------------------------------------
# Deterministic parameter init (mirrors init_weights: truncated-normal weights
# with std = 1/(2*sqrt(in_dim)), zero biases; max/min logvar = -2 / -5).
# -----------------------------------------------------------------------------
def init_params(key, state_size, action_size, reward_size, ensemble_size,
                hidden_size):
    in_dim = state_size + action_size
    output_dim = state_size + reward_size
    dims = [(in_dim, hidden_size),
            (hidden_size, hidden_size),
            (hidden_size, hidden_size),
            (hidden_size, hidden_size),
            (hidden_size, 2 * output_dim)]
    params = {}
    for i, (di, do) in enumerate(dims, start=1):
        key, wk = jax.random.split(key)
        std = 1.0 / (2.0 * jnp.sqrt(jnp.float32(di)))
        w = jax.random.truncated_normal(wk, -2.0, 2.0,
                                        (ensemble_size, di, do),
                                        dtype=jnp.float32) * std
        params[f"w{i}"] = w
        params[f"b{i}"] = jnp.zeros((ensemble_size, do), dtype=jnp.float32)
    params["max_logvar"] = jnp.full((1, output_dim), -2.0, dtype=jnp.float32)
    params["min_logvar"] = jnp.full((1, output_dim), -5.0, dtype=jnp.float32)
    return params


# -----------------------------------------------------------------------------
# Pure-JAX reference (mirrors the kernel's bf16-matmul / f32-accumulate
# precision so the correctness check can use a tight tolerance).
# -----------------------------------------------------------------------------
def reference_forward(x, params, ret_log_var=False):
    def fc(h, w, b):
        y = jnp.einsum("eni,eio->eno",
                       h.astype(jnp.bfloat16), w.astype(jnp.bfloat16),
                       preferred_element_type=jnp.float32)
        return y + b[:, None, :]

    def swish(y):
        return y * jax.nn.sigmoid(y)

    h = swish(fc(x, params["w1"], params["b1"]))
    h = swish(fc(h, params["w2"], params["b2"]))
    h = swish(fc(h, params["w3"], params["b3"]))
    h = swish(fc(h, params["w4"], params["b4"]))
    y5 = fc(h, params["w5"], params["b5"])
    out_dim = params["max_logvar"].shape[-1]
    mean = y5[:, :, :out_dim]
    logvar = params["max_logvar"] - jax.nn.softplus(
        params["max_logvar"] - y5[:, :, out_dim:])
    logvar = params["min_logvar"] + jax.nn.softplus(
        logvar - params["min_logvar"])
    if ret_log_var:
        return mean, logvar
    return mean, jnp.exp(logvar)


if __name__ == "__main__":
    # Small shapes consistent with the module's forward.
    state_size, action_size, reward_size = 8, 4, 1
    ensemble_size, hidden_size, N = 4, 32, 8

    key = jax.random.PRNGKey(0)
    pkey, xkey = jax.random.split(key)
    params = init_params(pkey, state_size, action_size, reward_size,
                         ensemble_size, hidden_size)
    x = jax.random.normal(
        xkey, (ensemble_size, N, state_size + action_size), dtype=jnp.float32)

    # ret_log_var=False path
    mean, var = ensemble_model_forward(x, params, ret_log_var=False)
    jax.block_until_ready((mean, var))
    mean_ref, var_ref = reference_forward(x, params, ret_log_var=False)
    assert jnp.allclose(mean, mean_ref, atol=2e-3, rtol=2e-3)
    assert jnp.allclose(var, var_ref, atol=2e-3, rtol=2e-3)

    # ret_log_var=True path
    mean2, logvar2 = ensemble_model_forward(x, params, ret_log_var=True)
    jax.block_until_ready((mean2, logvar2))
    mean_ref2, logvar_ref2 = reference_forward(x, params, ret_log_var=True)
    assert jnp.allclose(mean2, mean_ref2, atol=2e-3, rtol=2e-3)
    assert jnp.allclose(logvar2, logvar_ref2, atol=2e-3, rtol=2e-3)

    print("KERNEL_OK")
</pallas_src>

<mosaic_0001>
module attributes {stable_mosaic.version = 11 : i64} {
  func.func @_ensemble_kernel(%arg0: i32, %arg1: i32, %arg2: memref<1x8x128xbf16, #tpu.memory_space<vmem>>, %arg3: memref<1x128x128xbf16, #tpu.memory_space<vmem>>, %arg4: memref<1x1x128xf32, #tpu.memory_space<vmem>>, %arg5: memref<1x128x128xbf16, #tpu.memory_space<vmem>>, %arg6: memref<1x1x128xf32, #tpu.memory_space<vmem>>, %arg7: memref<1x128x128xbf16, #tpu.memory_space<vmem>>, %arg8: memref<1x1x128xf32, #tpu.memory_space<vmem>>, %arg9: memref<1x128x128xbf16, #tpu.memory_space<vmem>>, %arg10: memref<1x1x128xf32, #tpu.memory_space<vmem>>, %arg11: memref<1x128x128xbf16, #tpu.memory_space<vmem>>, %arg12: memref<1x1x128xf32, #tpu.memory_space<vmem>>, %arg13: memref<1x128x128xbf16, #tpu.memory_space<vmem>>, %arg14: memref<1x1x128xf32, #tpu.memory_space<vmem>>, %arg15: memref<1x128xf32, #tpu.memory_space<vmem>>, %arg16: memref<1x128xf32, #tpu.memory_space<vmem>>, %arg17: memref<1x8x128xf32, #tpu.memory_space<vmem>>, %arg18: memref<1x8x128xf32, #tpu.memory_space<vmem>>) attributes {dimension_semantics = [#tpu.dimension_semantics<parallel>, #tpu.dimension_semantics<parallel>], iteration_bounds = array<i64: 4, 1>, scalar_prefetch = 0 : i64, scratch_operands = 0 : i64, tpu.core_type = #tpu.core_type<tc>, window_params = [{transform_indices = @transform_0, window_bounds = array<i64: 1, 8, 128>}, {transform_indices = @transform_1, window_bounds = array<i64: 1, 128, 128>}, {transform_indices = @transform_2, window_bounds = array<i64: 1, 1, 128>}, {transform_indices = @transform_3, window_bounds = array<i64: 1, 128, 128>}, {transform_indices = @transform_4, window_bounds = array<i64: 1, 1, 128>}, {transform_indices = @transform_5, window_bounds = array<i64: 1, 128, 128>}, {transform_indices = @transform_6, window_bounds = array<i64: 1, 1, 128>}, {transform_indices = @transform_7, window_bounds = array<i64: 1, 128, 128>}, {transform_indices = @transform_8, window_bounds = array<i64: 1, 1, 128>}, {transform_indices = @transform_9, window_bounds = array<i64: 1, 128, 128>}, {transform_indices = @transform_10, window_bounds = array<i64: 1, 1, 128>}, {transform_indices = @transform_11, window_bounds = array<i64: 1, 128, 128>}, {transform_indices = @transform_12, window_bounds = array<i64: 1, 1, 128>}, {pipeline_mode = #tpu.pipeline_mode<synchronous>, transform_indices = @transform_13, window_bounds = array<i64: 1, 128>}, {pipeline_mode = #tpu.pipeline_mode<synchronous>, transform_indices = @transform_14, window_bounds = array<i64: 1, 128>}, {transform_indices = @transform_15, window_bounds = array<i64: 1, 8, 128>}, {transform_indices = @transform_16, window_bounds = array<i64: 1, 8, 128>}]} {
    %c0 = arith.constant 0 : index
    %c0_0 = arith.constant 0 : index
    %c0_1 = arith.constant 0 : index
    %0 = vector.load %arg2[%c0, %c0_0, %c0_1] : memref<1x8x128xbf16, #tpu.memory_space<vmem>>, vector<1x8x128xbf16>
    %1 = vector.shape_cast %0 : vector<1x8x128xbf16> to vector<8x128xbf16>
    %c0_2 = arith.constant 0 : index
    %c0_3 = arith.constant 0 : index
    %c0_4 = arith.constant 0 : index
    %2 = vector.load %arg3[%c0_2, %c0_3, %c0_4] : memref<1x128x128xbf16, #tpu.memory_space<vmem>>, vector<1x128x128xbf16>
    %3 = vector.shape_cast %2 : vector<1x128x128xbf16> to vector<128x128xbf16>
    %cst = arith.constant dense<0.000000e+00> : vector<8x128xf32>
    %4 = tpu.matmul %1, %3, %cst {dimension_numbers = #tpu.dot_dimension_numbers<[1], [0], [0], [1], [0, 0, 1, 1], [], []>} : vector<8x128xbf16>, vector<128x128xbf16>, vector<8x128xf32> -> vector<8x128xf32>
    %c0_5 = arith.constant 0 : index
    %c0_6 = arith.constant 0 : index
    %c0_7 = arith.constant 0 : index
    %5 = vector.load %arg4[%c0_5, %c0_6, %c0_7] : memref<1x1x128xf32, #tpu.memory_space<vmem>>, vector<1x1x128xf32>
    %6 = vector.shape_cast %5 : vector<1x1x128xf32> to vector<1x128xf32>
    %7 = vector.broadcast %6 : vector<1x128xf32> to vector<8x128xf32>
    %8 = arith.addf %4, %7 : vector<8x128xf32>
    %9 = arith.negf %8 : vector<8x128xf32>
    %10 = math.exp %9 : vector<8x128xf32>
    %cst_8 = arith.constant 1.000000e+00 : f32
    %11 = vector.broadcast %cst_8 : f32 to vector<8x128xf32>
    %12 = arith.addf %11, %10 : vector<8x128xf32>
    %13 = arith.divf %11, %12 : vector<8x128xf32>
    %14 = arith.mulf %8, %13 : vector<8x128xf32>
    %15 = arith.truncf %14 : vector<8x128xf32> to vector<8x128xbf16>
    %c0_9 = arith.constant 0 : index
    %c0_10 = arith.constant 0 : index
    %c0_11 = arith.constant 0 : index
    %16 = vector.load %arg5[%c0_9, %c0_10, %c0_11] : memref<1x128x128xbf16, #tpu.memory_space<vmem>>, vector<1x128x128xbf16>
    %17 = vector.shape_cast %16 : vector<1x128x128xbf16> to vector<128x128xbf16>
    %cst_12 = arith.constant dense<0.000000e+00> : vector<8x128xf32>
    %18 = tpu.matmul %15, %17, %cst_12 {dimension_numbers = #tpu.dot_dimension_numbers<[1], [0], [0], [1], [0, 0, 1, 1], [], []>} : vector<8x128xbf16>, vector<128x128xbf16>, vector<8x128xf32> -> vector<8x128xf32>
    %c0_13 = arith.constant 0 : index
    %c0_14 = arith.constant 0 : index
    %c0_15 = arith.constant 0 : index
    %19 = vector.load %arg6[%c0_13, %c0_14, %c0_15] : memref<1x1x128xf32, #tpu.memory_space<vmem>>, vector<1x1x128xf32>
    %20 = vector.shape_cast %19 : vector<1x1x128xf32> to vector<1x128xf32>
    %21 = vector.broadcast %20 : vector<1x128xf32> to vector<8x128xf32>
    %22 = arith.addf %18, %21 : vector<8x128xf32>
    %23 = arith.negf %22 : vector<8x128xf32>
    %24 = math.exp %23 : vector<8x128xf32>
    %cst_16 = arith.constant 1.000000e+00 : f32
    %25 = vector.broadcast %cst_16 : f32 to vector<8x128xf32>
    %26 = arith.addf %25, %24 : vector<8x128xf32>
    %27 = arith.divf %25, %26 : vector<8x128xf32>
    %28 = arith.mulf %22, %27 : vector<8x128xf32>
    %29 = arith.truncf %28 : vector<8x128xf32> to vector<8x128xbf16>
    %c0_17 = arith.constant 0 : index
    %c0_18 = arith.constant 0 : index
    %c0_19 = arith.constant 0 : index
    %30 = vector.load %arg7[%c0_17, %c0_18, %c0_19] : memref<1x128x128xbf16, #tpu.memory_space<vmem>>, vector<1x128x128xbf16>
    %31 = vector.shape_cast %30 : vector<1x128x128xbf16> to vector<128x128xbf16>
    %cst_20 = arith.constant dense<0.000000e+00> : vector<8x128xf32>
    %32 = tpu.matmul %29, %31, %cst_20 {dimension_numbers = #tpu.dot_dimension_numbers<[1], [0], [0], [1], [0, 0, 1, 1], [], []>} : vector<8x128xbf16>, vector<128x128xbf16>, vector<8x128xf32> -> vector<8x128xf32>
    %c0_21 = arith.constant 0 : index
    %c0_22 = arith.constant 0 : index
    %c0_23 = arith.constant 0 : index
    %33 = vector.load %arg8[%c0_21, %c0_22, %c0_23] : memref<1x1x128xf32, #tpu.memory_space<vmem>>, vector<1x1x128xf32>
    %34 = vector.shape_cast %33 : vector<1x1x128xf32> to vector<1x128xf32>
    %35 = vector.broadcast %34 : vector<1x128xf32> to vector<8x128xf32>
    %36 = arith.addf %32, %35 : vector<8x128xf32>
    %37 = arith.negf %36 : vector<8x128xf32>
    %38 = math.exp %37 : vector<8x128xf32>
    %cst_24 = arith.constant 1.000000e+00 : f32
    %39 = vector.broadcast %cst_24 : f32 to vector<8x128xf32>
    %40 = arith.addf %39, %38 : vector<8x128xf32>
    %41 = arith.divf %39, %40 : vector<8x128xf32>
    %42 = arith.mulf %36, %41 : vector<8x128xf32>
    %43 = arith.truncf %42 : vector<8x128xf32> to vector<8x128xbf16>
    %c0_25 = arith.constant 0 : index
    %c0_26 = arith.constant 0 : index
    %c0_27 = arith.constant 0 : index
    %44 = vector.load %arg9[%c0_25, %c0_26, %c0_27] : memref<1x128x128xbf16, #tpu.memory_space<vmem>>, vector<1x128x128xbf16>
    %45 = vector.shape_cast %44 : vector<1x128x128xbf16> to vector<128x128xbf16>
    %cst_28 = arith.constant dense<0.000000e+00> : vector<8x128xf32>
    %46 = tpu.matmul %43, %45, %cst_28 {dimension_numbers = #tpu.dot_dimension_numbers<[1], [0], [0], [1], [0, 0, 1, 1], [], []>} : vector<8x128xbf16>, vector<128x128xbf16>, vector<8x128xf32> -> vector<8x128xf32>
    %c0_29 = arith.constant 0 : index
    %c0_30 = arith.constant 0 : index
    %c0_31 = arith.constant 0 : index
    %47 = vector.load %arg10[%c0_29, %c0_30, %c0_31] : memref<1x1x128xf32, #tpu.memory_space<vmem>>, vector<1x1x128xf32>
    %48 = vector.shape_cast %47 : vector<1x1x128xf32> to vector<1x128xf32>
    %49 = vector.broadcast %48 : vector<1x128xf32> to vector<8x128xf32>
    %50 = arith.addf %46, %49 : vector<8x128xf32>
    %51 = arith.negf %50 : vector<8x128xf32>
    %52 = math.exp %51 : vector<8x128xf32>
    %cst_32 = arith.constant 1.000000e+00 : f32
    %53 = vector.broadcast %cst_32 : f32 to vector<8x128xf32>
    %54 = arith.addf %53, %52 : vector<8x128xf32>
    %55 = arith.divf %53, %54 : vector<8x128xf32>
    %56 = arith.mulf %50, %55 : vector<8x128xf32>
    %57 = arith.truncf %56 : vector<8x128xf32> to vector<8x128xbf16>
    %c0_33 = arith.constant 0 : index
    %c0_34 = arith.constant 0 : index
    %c0_35 = arith.constant 0 : index
    %58 = vector.load %arg11[%c0_33, %c0_34, %c0_35] : memref<1x128x128xbf16, #tpu.memory_space<vmem>>, vector<1x128x128xbf16>
    %59 = vector.shape_cast %58 : vector<1x128x128xbf16> to vector<128x128xbf16>
    %cst_36 = arith.constant dense<0.000000e+00> : vector<8x128xf32>
    %60 = tpu.matmul %57, %59, %cst_36 {dimension_numbers = #tpu.dot_dimension_numbers<[1], [0], [0], [1], [0, 0, 1, 1], [], []>} : vector<8x128xbf16>, vector<128x128xbf16>, vector<8x128xf32> -> vector<8x128xf32>
    %c0_37 = arith.constant 0 : index
    %c0_38 = arith.constant 0 : index
    %c0_39 = arith.constant 0 : index
    %61 = vector.load %arg12[%c0_37, %c0_38, %c0_39] : memref<1x1x128xf32, #tpu.memory_space<vmem>>, vector<1x1x128xf32>
    %62 = vector.shape_cast %61 : vector<1x1x128xf32> to vector<1x128xf32>
    %63 = vector.broadcast %62 : vector<1x128xf32> to vector<8x128xf32>
    %64 = arith.addf %60, %63 : vector<8x128xf32>
    %c0_40 = arith.constant 0 : index
    %c0_41 = arith.constant 0 : index
    %c0_42 = arith.constant 0 : index
    %65 = vector.load %arg13[%c0_40, %c0_41, %c0_42] : memref<1x128x128xbf16, #tpu.memory_space<vmem>>, vector<1x128x128xbf16>
    %66 = vector.shape_cast %65 : vector<1x128x128xbf16> to vector<128x128xbf16>
    %cst_43 = arith.constant dense<0.000000e+00> : vector<8x128xf32>
    %67 = tpu.matmul %57, %66, %cst_43 {dimension_numbers = #tpu.dot_dimension_numbers<[1], [0], [0], [1], [0, 0, 1, 1], [], []>} : vector<8x128xbf16>, vector<128x128xbf16>, vector<8x128xf32> -> vector<8x128xf32>
    %c0_44 = arith.constant 0 : index
    %c0_45 = arith.constant 0 : index
    %c0_46 = arith.constant 0 : index
    %68 = vector.load %arg14[%c0_44, %c0_45, %c0_46] : memref<1x1x128xf32, #tpu.memory_space<vmem>>, vector<1x1x128xf32>
    %69 = vector.shape_cast %68 : vector<1x1x128xf32> to vector<1x128xf32>
    %70 = vector.broadcast %69 : vector<1x128xf32> to vector<8x128xf32>
    %71 = arith.addf %67, %70 : vector<8x128xf32>
    %c0_47 = arith.constant 0 : index
    %c0_48 = arith.constant 0 : index
    %72 = vector.load %arg15[%c0_47, %c0_48] : memref<1x128xf32, #tpu.memory_space<vmem>>, vector<1x128xf32>
    %c0_49 = arith.constant 0 : index
    %c0_50 = arith.constant 0 : index
    %73 = vector.load %arg16[%c0_49, %c0_50] : memref<1x128xf32, #tpu.memory_space<vmem>>, vector<1x128xf32>
    %74 = vector.broadcast %72 : vector<1x128xf32> to vector<8x128xf32>
    %75 = arith.subf %74, %71 : vector<8x128xf32>
    %cst_51 = arith.constant 0.000000e+00 : f32
    %76 = vector.broadcast %cst_51 : f32 to vector<8x128xf32>
    %77 = arith.maximumf %75, %76 : vector<8x128xf32>
    %78 = vector.broadcast %cst_51 : f32 to vector<8x128xf32>
    %79 = arith.subf %75, %78 : vector<8x128xf32>
    %80 = arith.cmpf one, %79, %79 : vector<8x128xf32>
    %81 = vector.broadcast %cst_51 : f32 to vector<8x128xf32>
    %82 = arith.addf %75, %81 : vector<8x128xf32>
    %83 = math.absf %79 : vector<8x128xf32>
    %cst_52 = arith.constant 0.000000e+00 : f32
    %84 = vector.broadcast %cst_52 : f32 to vector<8x128xf32>
    %85 = arith.subf %84, %83 : vector<8x128xf32>
    %86 = math.exp %85 : vector<8x128xf32>
    %87 = math.log1p %86 : vector<8x128xf32>
    %88 = arith.addf %77, %87 : vector<8x128xf32>
    %89 = arith.select %80, %82, %88 : vector<8x128xi1>, vector<8x128xf32>
    %90 = vector.broadcast %72 : vector<1x128xf32> to vector<8x128xf32>
    %91 = arith.subf %90, %89 : vector<8x128xf32>
    %92 = vector.broadcast %73 : vector<1x128xf32> to vector<8x128xf32>
    %93 = arith.subf %91, %92 : vector<8x128xf32>
    %cst_53 = arith.constant 0.000000e+00 : f32
    %94 = vector.broadcast %cst_53 : f32 to vector<8x128xf32>
    %95 = arith.maximumf %93, %94 : vector<8x128xf32>
    %96 = vector.broadcast %cst_53 : f32 to vector<8x128xf32>
    %97 = arith.subf %93, %96 : vector<8x128xf32>
    %98 = arith.cmpf one, %97, %97 : vector<8x128xf32>
    %99 = vector.broadcast %cst_53 : f32 to vector<8x128xf32>
    %100 = arith.addf %93, %99 : vector<8x128xf32>
    %101 = math.absf %97 : vector<8x128xf32>
    %cst_54 = arith.constant 0.000000e+00 : f32
    %102 = vector.broadcast %cst_54 : f32 to vector<8x128xf32>
    %103 = arith.subf %102, %101 : vector<8x128xf32>
    %104 = math.exp %103 : vector<8x128xf32>
    %105 = math.log1p %104 : vector<8x128xf32>
    %106 = arith.addf %95, %105 : vector<8x128xf32>
    %107 = arith.select %98, %100, %106 : vector<8x128xi1>, vector<8x128xf32>
    %108 = vector.broadcast %73 : vector<1x128xf32> to vector<8x128xf32>
    %109 = arith.addf %108, %107 : vector<8x128xf32>
    %c0_55 = arith.constant 0 : index
    %c0_56 = arith.constant 0 : index
    %c0_57 = arith.constant 0 : index
    %110 = vector.load %arg17[%c0_55, %c0_56, %c0_57] : memref<1x8x128xf32, #tpu.memory_space<vmem>>, vector<1x8x128xf32>
    %111 = vector.shape_cast %110 : vector<1x8x128xf32> to vector<8x128xf32>
    %112 = vector.shape_cast %64 : vector<8x128xf32> to vector<1x8x128xf32>
    tpu.vector_store %arg17[%c0_55, %c0_56, %c0_57], %112 {strides = array<i32>} : memref<1x8x128xf32, #tpu.memory_space<vmem>>, vector<1x8x128xf32>,
    %113 = math.exp %109 : vector<8x128xf32>
    %c0_58 = arith.constant 0 : index
    %c0_59 = arith.constant 0 : index
    %c0_60 = arith.constant 0 : index
    %114 = vector.load %arg18[%c0_58, %c0_59, %c0_60] : memref<1x8x128xf32, #tpu.memory_space<vmem>>, vector<1x8x128xf32>
    %115 = vector.shape_cast %114 : vector<1x8x128xf32> to vector<8x128xf32>
    %116 = vector.shape_cast %113 : vector<8x128xf32> to vector<1x8x128xf32>
    tpu.vector_store %arg18[%c0_58, %c0_59, %c0_60], %116 {strides = array<i32>} : memref<1x8x128xf32, #tpu.memory_space<vmem>>, vector<1x8x128xf32>,
    return
  }
  func.func @transform_0(%arg0: i32, %arg1: i32) -> (i32, i32, i32) {
    %c0_i32 = arith.constant 0 : i32
    %c0_i32_0 = arith.constant 0 : i32
    return %arg0, %arg1, %c0_i32 : i32, i32, i32
  }
  func.func @transform_1(%arg0: i32, %arg1: i32) -> (i32, i32, i32) {
    %c0_i32 = arith.constant 0 : i32
    %c0_i32_0 = arith.constant 0 : i32
    %c0_i32_1 = arith.constant 0 : i32
    return %arg0, %c0_i32, %c0_i32_0 : i32, i32, i32
  }
  func.func @transform_2(%arg0: i32, %arg1: i32) -> (i32, i32, i32) {
    %c0_i32 = arith.constant 0 : i32
    %c0_i32_0 = arith.constant 0 : i32
    %c0_i32_1 = arith.constant 0 : i32
    return %arg0, %c0_i32, %c0_i32_0 : i32, i32, i32
  }
  func.func @transform_3(%arg0: i32, %arg1: i32) -> (i32, i32, i32) {
    %c0_i32 = arith.constant 0 : i32
    %c0_i32_0 = arith.constant 0 : i32
    %c0_i32_1 = arith.constant 0 : i32
    return %arg0, %c0_i32, %c0_i32_0 : i32, i32, i32
  }
  func.func @transform_4(%arg0: i32, %arg1: i32) -> (i32, i32, i32) {
    %c0_i32 = arith.constant 0 : i32
    %c0_i32_0 = arith.constant 0 : i32
    %c0_i32_1 = arith.constant 0 : i32
    return %arg0, %c0_i32, %c0_i32_0 : i32, i32, i32
  }
  func.func @transform_5(%arg0: i32, %arg1: i32) -> (i32, i32, i32) {
    %c0_i32 = arith.constant 0 : i32
    %c0_i32_0 = arith.constant 0 : i32
    %c0_i32_1 = arith.constant 0 : i32
    return %arg0, %c0_i32, %c0_i32_0 : i32, i32, i32
  }
  func.func @transform_6(%arg0: i32, %arg1: i32) -> (i32, i32, i32) {
    %c0_i32 = arith.constant 0 : i32
    %c0_i32_0 = arith.constant 0 : i32
    %c0_i32_1 = arith.constant 0 : i32
    return %arg0, %c0_i32, %c0_i32_0 : i32, i32, i32
  }
  func.func @transform_7(%arg0: i32, %arg1: i32) -> (i32, i32, i32) {
    %c0_i32 = arith.constant 0 : i32
    %c0_i32_0 = arith.constant 0 : i32
    %c0_i32_1 = arith.constant 0 : i32
    return %arg0, %c0_i32, %c0_i32_0 : i32, i32, i32
  }
  func.func @transform_8(%arg0: i32, %arg1: i32) -> (i32, i32, i32) {
    %c0_i32 = arith.constant 0 : i32
    %c0_i32_0 = arith.constant 0 : i32
    %c0_i32_1 = arith.constant 0 : i32
    return %arg0, %c0_i32, %c0_i32_0 : i32, i32, i32
  }
  func.func @transform_9(%arg0: i32, %arg1: i32) -> (i32, i32, i32) {
    %c0_i32 = arith.constant 0 : i32
    %c0_i32_0 = arith.constant 0 : i32
    %c0_i32_1 = arith.constant 0 : i32
    return %arg0, %c0_i32, %c0_i32_0 : i32, i32, i32
  }
  func.func @transform_10(%arg0: i32, %arg1: i32) -> (i32, i32, i32) {
    %c0_i32 = arith.constant 0 : i32
    %c0_i32_0 = arith.constant 0 : i32
    %c0_i32_1 = arith.constant 0 : i32
    return %arg0, %c0_i32, %c0_i32_0 : i32, i32, i32
  }
  func.func @transform_11(%arg0: i32, %arg1: i32) -> (i32, i32, i32) {
    %c0_i32 = arith.constant 0 : i32
    %c0_i32_0 = arith.constant 0 : i32
    %c0_i32_1 = arith.constant 0 : i32
    return %arg0, %c0_i32, %c0_i32_0 : i32, i32, i32
  }
  func.func @transform_12(%arg0: i32, %arg1: i32) -> (i32, i32, i32) {
    %c0_i32 = arith.constant 0 : i32
    %c0_i32_0 = arith.constant 0 : i32
    %c0_i32_1 = arith.constant 0 : i32
    return %arg0, %c0_i32, %c0_i32_0 : i32, i32, i32
  }
  func.func @transform_13(%arg0: i32, %arg1: i32) -> (i32, i32) {
    %c0_i32 = arith.constant 0 : i32
    %c0_i32_0 = arith.constant 0 : i32
    %c0_i32_1 = arith.constant 0 : i32
    return %c0_i32, %c0_i32_0 : i32, i32
  }
  func.func @transform_14(%arg0: i32, %arg1: i32) -> (i32, i32) {
    %c0_i32 = arith.constant 0 : i32
    %c0_i32_0 = arith.constant 0 : i32
    %c0_i32_1 = arith.constant 0 : i32
    return %c0_i32, %c0_i32_0 : i32, i32
  }
  func.func @transform_15(%arg0: i32, %arg1: i32) -> (i32, i32, i32) {
    %c0_i32 = arith.constant 0 : i32
    %c0_i32_0 = arith.constant 0 : i32
    return %arg0, %arg1, %c0_i32 : i32, i32, i32
  }
  func.func @transform_16(%arg0: i32, %arg1: i32) -> (i32, i32, i32) {
    %c0_i32 = arith.constant 0 : i32
    %c0_i32_0 = arith.constant 0 : i32
    return %arg0, %arg1, %c0_i32 : i32, i32, i32
  }
}

</mosaic_0001>

<llo_original>
// kernel: tpu_custom_call.1
$region0: #{tpu_custom_call.1}
  #allocation0 [shape = 'u32[]', space=smem, size = 0x4, offset = 0x4, fixed_abs, tag = 'smem constant byte address 0x4 - core index']
  #allocation1 [shape = 'u32[144,128]{1,0:T(1,128)}', space=vmem, size = 0x12000, scoped, tag = 'internal scratch']
  %s0 = inlined_call_operand.hbm [shape: bf16[4,8,128], index: 0, kind: input, shape index: {}]
  %s1 = inlined_call_operand.hbm [shape: bf16[4,128,128], index: 1, kind: input, shape index: {}]
  %s2 = inlined_call_operand.hbm [shape: f32[4,1,128], index: 2, kind: input, shape index: {}]
  %s3 = inlined_call_operand.hbm [shape: bf16[4,128,128], index: 3, kind: input, shape index: {}]
  %s4 = inlined_call_operand.vmem [shape: f32[4,1,128], index: 4, kind: input, shape index: {}]
  %s5 = inlined_call_operand.hbm [shape: bf16[4,128,128], index: 5, kind: input, shape index: {}]
  %s6 = inlined_call_operand.vmem [shape: f32[4,1,128], index: 6, kind: input, shape index: {}]
  %s7 = inlined_call_operand.hbm [shape: bf16[4,128,128], index: 7, kind: input, shape index: {}]
  %s8 = inlined_call_operand.vmem [shape: f32[4,1,128], index: 8, kind: input, shape index: {}]
  %s9 = inlined_call_operand.hbm [shape: bf16[4,128,128], index: 9, kind: input, shape index: {}]
  %s10 = inlined_call_operand.vmem [shape: f32[4,1,128], index: 10, kind: input, shape index: {}]
  %s11 = inlined_call_operand.hbm [shape: bf16[4,128,128], index: 11, kind: input, shape index: {}]
  %s12 = inlined_call_operand.vmem [shape: f32[4,1,128], index: 12, kind: input, shape index: {}]
  %s13 = inlined_call_operand.vmem [shape: f32[1,128], index: 13, kind: input, shape index: {}]
  %s14 = inlined_call_operand.vmem [shape: f32[1,128], index: 14, kind: input, shape index: {}]
  %s15 = inlined_call_operand.hbm [shape: f32[4,8,128], index: 15, kind: output, shape index: {0}]
  %s16 = inlined_call_operand.hbm [shape: f32[4,8,128], index: 16, kind: output, shape index: {1}]
  %17 = xla_tuple %s15, %s16
  %s18 = sld [smem:[#allocation0]]
  $region133: #{tpu_custom_call.1} parent=0
    _
  %s20 = ssub.s32 1, %s18
  %s21 = scalar_select 0, %s20, %s18
  $region1: #{tpu_custom_call.1} parent=0
    #allocation2 [shape = 'u8[4096]{0}', space=vmem, size = 0x1000, scoped, tag = 'input window, operand 0']
    #allocation3 [shape = 's32[2]{0}', space=sflag, size = 0x8, scoped, tag = 'scoped memory for tpu_custom_call.1']
    #allocation4 [shape = 's32[2]{0}', space=sflag, size = 0x8, scoped, tag = 'scoped memory for tpu_custom_call.1']
    #allocation5 [shape = 'u8[65536]{0}', space=vmem, size = 0x10000, scoped, tag = 'input window, operand 1']
    #allocation6 [shape = 's32[2]{0}', space=sflag, size = 0x8, scoped, tag = 'scoped memory for tpu_custom_call.1']
    #allocation7 [shape = 'u8[1024]{0}', space=vmem, size = 0x400, scoped, tag = 'input window, operand 2']
    #allocation8 [shape = 'u8[65536]{0}', space=vmem, size = 0x10000, scoped, tag = 'input window, operand 3']
    #allocation9 [shape = 's32[2]{0}', space=sflag, size = 0x8, scoped, tag = 'scoped memory for tpu_custom_call.1']
    #allocation10 [shape = 'u8[65536]{0}', space=vmem, size = 0x10000, scoped, tag = 'input window, operand 5']
    #allocation11 [shape = 'u8[65536]{0}', space=vmem, size = 0x10000, scoped, tag = 'input window, operand 7']
    #allocation12 [shape = 's32[2]{0}', space=sflag, size = 0x8, scoped, tag = 'scoped memory for tpu_custom_call.1']
    #allocation13 [shape = 'u8[65536]{0}', space=vmem, size = 0x10000, scoped, tag = 'input window, operand 9']
    #allocation14 [shape = 'u8[65536]{0}', space=vmem, size = 0x10000, scoped, tag = 'input window, operand 11']
    #allocation15 [shape = 's32[2]{0}', space=sflag, size = 0x8, scoped, tag = 'scoped memory for tpu_custom_call.1']
    #allocation16 [shape = 'u8[8192]{0}', space=vmem, size = 0x2000, scoped, tag = 'output window, operand 0']
    #allocation17 [shape = 'u8[8192]{0}', space=vmem, size = 0x2000, scoped, tag = 'output window, operand 1']
    #allocation18 [shape = 's32[2]{0}', space=sflag, size = 0x8, scoped, tag = 'scoped memory for tpu_custom_call.1']
    %22 = vsyncpa [#allocation3], 0
    %s23 = scalar_lea.sflag [#allocation3], 1
    %24 = vsyncpa %s23, 0
    %25 = vsyncpa [#allocation6], 0
    %s26 = scalar_lea.sflag [#allocation6], 1
    %27 = vsyncpa %s26, 0
    %28 = vsyncpa [#allocation9], 0
    %s29 = scalar_lea.sflag [#allocation9], 1
    %30 = vsyncpa %s29, 0
    %31 = vsyncpa [#allocation12], 0
    %s32 = scalar_lea.sflag [#allocation12], 1
    %33 = vsyncpa %s32, 0
    %34 = vsyncpa [#allocation15], 0
    %s35 = scalar_lea.sflag [#allocation15], 1
    %36 = vsyncpa %s35, 0
    %37 = vsyncpa [#allocation4], 0
    %s38 = scalar_lea.sflag [#allocation4], 1
    %39 = vsyncpa %s38, 0
    %40 = vsyncpa [#allocation18], 0
    %s41 = scalar_lea.sflag [#allocation18], 1
    %42 = vsyncpa %s41, 0
    loop: start=0, step=1, limit=6
    $region2: #{tpu_custom_call.1} parent=1 // loop_pre_header
      _
    $region3: #{tpu_custom_call.1} parent=1 // loop_header
      %s44 = sphi 0, %s48
      %p45 = scmp.ge.s32.totalorder %s44, 6
      %s51 = sphi 0, %s63
      %s52 = sphi 0, %s59
      %s53 = sphi 0, %s51
      %s54 = sphi 0, %s52
      %s55 = sphi 0, %s53
      %s56 = sphi 0, %s54
      %s68 = sphi 0, %s70
      %s71 = sphi 0, %s68
      %s72 = sphi 0, %s71
      %s88 = sphi 0, %s72
      %s94 = sphi 0, %s96
      %s97 = sphi 0, %s94
      %s98 = sphi 0, %s97
      %s114 = sphi 0, %s98
      %s120 = sphi 0, %s122
      %s123 = sphi 0, %s120
      %s124 = sphi 0, %s123
      %s140 = sphi 0, %s124
      %s146 = sphi 0, %s148
      %s149 = sphi 0, %s146
      %s150 = sphi 0, %s149
      %s166 = sphi 0, %s150
      %s172 = sphi 0, %s174
      %s175 = sphi 0, %s172
      %s176 = sphi 0, %s175
      %s192 = sphi 0, %s176
      %s198 = sphi 0, %s200
      %s201 = sphi 0, %s198
      %s202 = sphi 0, %s201
      %s218 = sphi 0, %s202
      %s224 = sphi 0, %s226
      %s227 = sphi 0, %s224
      %s228 = sphi 0, %s227
      %s244 = sphi 0, %s228
      %s250 = sphi 0, %s252
      %s253 = sphi 0, %s250
      %s254 = sphi 0, %s253
      %s270 = sphi 0, %s254
      %s276 = sphi 0, %s278
      %s279 = sphi 0, %s276
      %s280 = sphi 0, %s279
      %s296 = sphi 0, %s280
      %s302 = sphi 0, %s304
      %s305 = sphi 0, %s302
      %s306 = sphi 0, %s305
      %s322 = sphi 0, %s306
      %s328 = sphi 0, %s330
      %s331 = sphi 0, %s328
      %s332 = sphi 0, %s331
      %s348 = sphi 0, %s332
      %s354 = sphi 0, %s356
      %s357 = sphi 0, %s354
      %s358 = sphi 0, %s357
      %s374 = sphi 0, %s358
      %s380 = sphi 0, %s382
      %s383 = sphi 0, %s380
      %s384 = sphi 0, %s383
      %s400 = sphi 0, %s384
      %s404 = sphi 0, %s404
      %s406 = sphi 0, %s404
      %s407 = sphi 0, %s406
      %s421 = sphi 0, %s407
      %s425 = sphi 0, %s425
      %s427 = sphi 0, %s425
      %s428 = sphi 0, %s427
      %s442 = sphi 0, %s428
      %s450 = sphi 0, %s452
      %s453 = sphi 0, %s450
      %s454 = sphi 0, %s453
      %s470 = sphi 0, %s454
      %s478 = sphi 0, %s480
      %s481 = sphi 0, %s478
      %s482 = sphi 0, %s481
      %s498 = sphi 0, %s482
    $region4: #{tpu_custom_call.1} parent=1 // loop_header_branch
      %47 = sbr.rel (%p45) target = $region8
    $region5: #{tpu_custom_call.1} parent=1 // loop_body
      %s49 = ssub.s32 %s44, 1
      %s50 = ssub.s32 %s44, 2
      %s57 = sadd.s32 1, %s52
      %p58 = scmp.ge.s32.totalorder %s57, 1
      %s59 = scalar_select %p58, 0, %s57
      %s60 = sadd.s32 1, %s51
      %s61 = scalar_select %p58, %s60, %s51
      %p62 = scmp.ge.s32.totalorder %s61, 4
      %s63 = scalar_select %p62, 0, %s61
      %s64 = ssub.s32 %s51, %s63
      %s65 = ssub.s32 %s52, %s59
      %s66 = sor.u32 %s64, %s65
      %p67 = scmp.eq.s32.totalorder %s66, 0
      %s69 = sadd.s32 %s68, 1
      %s70 = scalar_select %p67, %s68, %s69
      %p73 = pneg %p67
      %p74 = scmp.eq.s32.totalorder %s44, 3
      %p75 = por %p73, %p74
      %p76 = scmp.ne.s32.totalorder %s68, %s71
      %p77 = scmp.eq.s32.totalorder %s44, 0
      %p78 = por %p76, %p77
      %p79 = scmp.ne.s32.totalorder %s68, %s71
      %p80 = scmp.eq.s32.totalorder %s49, 3
      %p81 = por %p79, %p80
      %p82 = scmp.ne.s32.totalorder %s71, %s72
      %p83 = scmp.eq.s32.totalorder %s49, 0
      %p84 = por %p82, %p83
      %p85 = scmp.ne.s32.totalorder %s71, %s72
      %p86 = scmp.eq.s32.totalorder %s50, 3
      %p87 = por %p85, %p86
      %p89 = scmp.ne.s32.totalorder %s72, %s88
      %p90 = scmp.eq.s32.totalorder %s50, 0
      %p91 = por %p89, %p90
      %s92 = ssub.s32 %s51, %s63
      %p93 = scmp.eq.s32.totalorder %s92, 0
      %s95 = sadd.s32 %s94, 1
      %s96 = scalar_select %p93, %s94, %s95
      %p99 = pneg %p93
      %p100 = scmp.eq.s32.totalorder %s44, 3
      %p101 = por %p99, %p100
      %p102 = scmp.ne.s32.totalorder %s94, %s97
      %p103 = scmp.eq.s32.totalorder %s44, 0
      %p104 = por %p102, %p103
      %p105 = scmp.ne.s32.totalorder %s94, %s97
      %p106 = scmp.eq.s32.totalorder %s49, 3
      %p107 = por %p105, %p106
      %p108 = scmp.ne.s32.totalorder %s97, %s98
      %p109 = scmp.eq.s32.totalorder %s49, 0
      %p110 = por %p108, %p109
      %p111 = scmp.ne.s32.totalorder %s97, %s98
      %p112 = scmp.eq.s32.totalorder %s50, 3
      %p113 = por %p111, %p112
      %p115 = scmp.ne.s32.totalorder %s98, %s114
      %p116 = scmp.eq.s32.totalorder %s50, 0
      %p117 = por %p115, %p116
      %s118 = ssub.s32 %s51, %s63
      %p119 = scmp.eq.s32.totalorder %s118, 0
      %s121 = sadd.s32 %s120, 1
      %s122 = scalar_select %p119, %s120, %s121
      %p125 = pneg %p119
      %p126 = scmp.eq.s32.totalorder %s44, 3
      %p127 = por %p125, %p126
      %p128 = scmp.ne.s32.totalorder %s120, %s123
      %p129 = scmp.eq.s32.totalorder %s44, 0
      %p130 = por %p128, %p129
      %p131 = scmp.ne.s32.totalorder %s120, %s123
      %p132 = scmp.eq.s32.totalorder %s49, 3
      %p133 = por %p131, %p132
      %p134 = scmp.ne.s32.totalorder %s123, %s124
      %p135 = scmp.eq.s32.totalorder %s49, 0
      %p136 = por %p134, %p135
      %p137 = scmp.ne.s32.totalorder %s123, %s124
      %p138 = scmp.eq.s32.totalorder %s50, 3
      %p139 = por %p137, %p138
      %p141 = scmp.ne.s32.totalorder %s124, %s140
      %p142 = scmp.eq.s32.totalorder %s50, 0
      %p143 = por %p141, %p142
      %s144 = ssub.s32 %s51, %s63
      %p145 = scmp.eq.s32.totalorder %s144, 0
      %s147 = sadd.s32 %s146, 1
      %s148 = scalar_select %p145, %s146, %s147
      %p151 = pneg %p145
      %p152 = scmp.eq.s32.totalorder %s44, 3
      %p153 = por %p151, %p152
      %p154 = scmp.ne.s32.totalorder %s146, %s149
      %p155 = scmp.eq.s32.totalorder %s44, 0
      %p156 = por %p154, %p155
      %p157 = scmp.ne.s32.totalorder %s146, %s149
      %p158 = scmp.eq.s32.totalorder %s49, 3
      %p159 = por %p157, %p158
      %p160 = scmp.ne.s32.totalorder %s149, %s150
      %p161 = scmp.eq.s32.totalorder %s49, 0
      %p162 = por %p160, %p161
      %p163 = scmp.ne.s32.totalorder %s149, %s150
      %p164 = scmp.eq.s32.totalorder %s50, 3
      %p165 = por %p163, %p164
      %p167 = scmp.ne.s32.totalorder %s150, %s166
      %p168 = scmp.eq.s32.totalorder %s50, 0
      %p169 = por %p167, %p168
      %s170 = ssub.s32 %s51, %s63
      %p171 = scmp.eq.s32.totalorder %s170, 0
      %s173 = sadd.s32 %s172, 1
      %s174 = scalar_select %p171, %s172, %s173
      %p177 = pneg %p171
      %p178 = scmp.eq.s32.totalorder %s44, 3
      %p179 = por %p177, %p178
      %p180 = scmp.ne.s32.totalorder %s172, %s175
      %p181 = scmp.eq.s32.totalorder %s44, 0
      %p182 = por %p180, %p181
      %p183 = scmp.ne.s32.totalorder %s172, %s175
      %p184 = scmp.eq.s32.totalorder %s49, 3
      %p185 = por %p183, %p184
      %p186 = scmp.ne.s32.totalorder %s175, %s176
      %p187 = scmp.eq.s32.totalorder %s49, 0
      %p188 = por %p186, %p187
      %p189 = scmp.ne.s32.totalorder %s175, %s176
      %p190 = scmp.eq.s32.totalorder %s50, 3
      %p191 = por %p189, %p190
      %p193 = scmp.ne.s32.totalorder %s176, %s192
      %p194 = scmp.eq.s32.totalorder %s50, 0
      %p195 = por %p193, %p194
      %s196 = ssub.s32 %s51, %s63
      %p197 = scmp.eq.s32.totalorder %s196, 0
      %s199 = sadd.s32 %s198, 1
      %s200 = scalar_select %p197, %s198, %s199
      %p203 = pneg %p197
      %p204 = scmp.eq.s32.totalorder %s44, 3
      %p205 = por %p203, %p204
      %p206 = scmp.ne.s32.totalorder %s198, %s201
      %p207 = scmp.eq.s32.totalorder %s44, 0
      %p208 = por %p206, %p207
      %p209 = scmp.ne.s32.totalorder %s198, %s201
      %p210 = scmp.eq.s32.totalorder %s49, 3
      %p211 = por %p209, %p210
      %p212 = scmp.ne.s32.totalorder %s201, %s202
      %p213 = scmp.eq.s32.totalorder %s49, 0
      %p214 = por %p212, %p213
      %p215 = scmp.ne.s32.totalorder %s201, %s202
      %p216 = scmp.eq.s32.totalorder %s50, 3
      %p217 = por %p215, %p216
      %p219 = scmp.ne.s32.totalorder %s202, %s218
      %p220 = scmp.eq.s32.totalorder %s50, 0
      %p221 = por %p219, %p220
      %s222 = ssub.s32 %s51, %s63
      %p223 = scmp.eq.s32.totalorder %s222, 0
      %s225 = sadd.s32 %s224, 1
      %s226 = scalar_select %p223, %s224, %s225
      %p229 = pneg %p223
      %p230 = scmp.eq.s32.totalorder %s44, 3
      %p231 = por %p229, %p230
      %p232 = scmp.ne.s32.totalorder %s224, %s227
      %p233 = scmp.eq.s32.totalorder %s44, 0
      %p234 = por %p232, %p233
      %p235 = scmp.ne.s32.totalorder %s224, %s227
      %p236 = scmp.eq.s32.totalorder %s49, 3
      %p237 = por %p235, %p236
      %p238 = scmp.ne.s32.totalorder %s227, %s228
      %p239 = scmp.eq.s32.totalorder %s49, 0
      %p240 = por %p238, %p239
      %p241 = scmp.ne.s32.totalorder %s227, %s228
      %p242 = scmp.eq.s32.totalorder %s50, 3
      %p243 = por %p241, %p242
      %p245 = scmp.ne.s32.totalorder %s228, %s244
      %p246 = scmp.eq.s32.totalorder %s50, 0
      %p247 = por %p245, %p246
      %s248 = ssub.s32 %s51, %s63
      %p249 = scmp.eq.s32.totalorder %s248, 0
      %s251 = sadd.s32 %s250, 1
      %s252 = scalar_select %p249, %s250, %s251
      %p255 = pneg %p249
      %p256 = scmp.eq.s32.totalorder %s44, 3
      %p257 = por %p255, %p256
      %p258 = scmp.ne.s32.totalorder %s250, %s253
      %p259 = scmp.eq.s32.totalorder %s44, 0
      %p260 = por %p258, %p259
      %p261 = scmp.ne.s32.totalorder %s250, %s253
      %p262 = scmp.eq.s32.totalorder %s49, 3
      %p263 = por %p261, %p262
      %p264 = scmp.ne.s32.totalorder %s253, %s254
      %p265 = scmp.eq.s32.totalorder %s49, 0
      %p266 = por %p264, %p265
      %p267 = scmp.ne.s32.totalorder %s253, %s254
      %p268 = scmp.eq.s32.totalorder %s50, 3
      %p269 = por %p267, %p268
      %p271 = scmp.ne.s32.totalorder %s254, %s270
      %p272 = scmp.eq.s32.totalorder %s50, 0
      %p273 = por %p271, %p272
      %s274 = ssub.s32 %s51, %s63
      %p275 = scmp.eq.s32.totalorder %s274, 0
      %s277 = sadd.s32 %s276, 1
      %s278 = scalar_select %p275, %s276, %s277
      %p281 = pneg %p275
      %p282 = scmp.eq.s32.totalorder %s44, 3
      %p283 = por %p281, %p282
      %p284 = scmp.ne.s32.totalorder %s276, %s279
      %p285 = scmp.eq.s32.totalorder %s44, 0
      %p286 = por %p284, %p285
      %p287 = scmp.ne.s32.totalorder %s276, %s279
      %p288 = scmp.eq.s32.totalorder %s49, 3
      %p289 = por %p287, %p288
      %p290 = scmp.ne.s32.totalorder %s279, %s280
      %p291 = scmp.eq.s32.totalorder %s49, 0
      %p292 = por %p290, %p291
      %p293 = scmp.ne.s32.totalorder %s279, %s280
      %p294 = scmp.eq.s32.totalorder %s50, 3
      %p295 = por %p293, %p294
      %p297 = scmp.ne.s32.totalorder %s280, %s296
      %p298 = scmp.eq.s32.totalorder %s50, 0
      %p299 = por %p297, %p298
      %s300 = ssub.s32 %s51, %s63
      %p301 = scmp.eq.s32.totalorder %s300, 0
      %s303 = sadd.s32 %s302, 1
      %s304 = scalar_select %p301, %s302, %s303
      %p307 = pneg %p301
      %p308 = scmp.eq.s32.totalorder %s44, 3
      %p309 = por %p307, %p308
      %p310 = scmp.ne.s32.totalorder %s302, %s305
      %p311 = scmp.eq.s32.totalorder %s44, 0
      %p312 = por %p310, %p311
      %p313 = scmp.ne.s32.totalorder %s302, %s305
      %p314 = scmp.eq.s32.totalorder %s49, 3
      %p315 = por %p313, %p314
      %p316 = scmp.ne.s32.totalorder %s305, %s306
      %p317 = scmp.eq.s32.totalorder %s49, 0
      %p318 = por %p316, %p317
      %p319 = scmp.ne.s32.totalorder %s305, %s306
      %p320 = scmp.eq.s32.totalorder %s50, 3
      %p321 = por %p319, %p320
      %p323 = scmp.ne.s32.totalorder %s306, %s322
      %p324 = scmp.eq.s32.totalorder %s50, 0
      %p325 = por %p323, %p324
      %s326 = ssub.s32 %s51, %s63
      %p327 = scmp.eq.s32.totalorder %s326, 0
      %s329 = sadd.s32 %s328, 1
      %s330 = scalar_select %p327, %s328, %s329
      %p333 = pneg %p327
      %p334 = scmp.eq.s32.totalorder %s44, 3
      %p335 = por %p333, %p334
      %p336 = scmp.ne.s32.totalorder %s328, %s331
      %p337 = scmp.eq.s32.totalorder %s44, 0
      %p338 = por %p336, %p337
      %p339 = scmp.ne.s32.totalorder %s328, %s331
      %p340 = scmp.eq.s32.totalorder %s49, 3
      %p341 = por %p339, %p340
      %p342 = scmp.ne.s32.totalorder %s331, %s332
      %p343 = scmp.eq.s32.totalorder %s49, 0
      %p344 = por %p342, %p343
      %p345 = scmp.ne.s32.totalorder %s331, %s332
      %p346 = scmp.eq.s32.totalorder %s50, 3
      %p347 = por %p345, %p346
      %p349 = scmp.ne.s32.totalorder %s332, %s348
      %p350 = scmp.eq.s32.totalorder %s50, 0
      %p351 = por %p349, %p350
      %s352 = ssub.s32 %s51, %s63
      %p353 = scmp.eq.s32.totalorder %s352, 0
      %s355 = sadd.s32 %s354, 1
      %s356 = scalar_select %p353, %s354, %s355
      %p359 = pneg %p353
      %p360 = scmp.eq.s32.totalorder %s44, 3
      %p361 = por %p359, %p360
      %p362 = scmp.ne.s32.totalorder %s354, %s357
      %p363 = scmp.eq.s32.totalorder %s44, 0
      %p364 = por %p362, %p363
      %p365 = scmp.ne.s32.totalorder %s354, %s357
      %p366 = scmp.eq.s32.totalorder %s49, 3
      %p367 = por %p365, %p366
      %p368 = scmp.ne.s32.totalorder %s357, %s358
      %p369 = scmp.eq.s32.totalorder %s49, 0
      %p370 = por %p368, %p369
      %p371 = scmp.ne.s32.totalorder %s357, %s358
      %p372 = scmp.eq.s32.totalorder %s50, 3
      %p373 = por %p371, %p372
      %p375 = scmp.ne.s32.totalorder %s358, %s374
      %p376 = scmp.eq.s32.totalorder %s50, 0
      %p377 = por %p375, %p376
      %s378 = ssub.s32 %s51, %s63
      %p379 = scmp.eq.s32.totalorder %s378, 0
      %s381 = sadd.s32 %s380, 1
      %s382 = scalar_select %p379, %s380, %s381
      %p385 = pneg %p379
      %p386 = scmp.eq.s32.totalorder %s44, 3
      %p387 = por %p385, %p386
      %p388 = scmp.ne.s32.totalorder %s380, %s383
      %p389 = scmp.eq.s32.totalorder %s44, 0
      %p390 = por %p388, %p389
      %p391 = scmp.ne.s32.totalorder %s380, %s383
      %p392 = scmp.eq.s32.totalorder %s49, 3
      %p393 = por %p391, %p392
      %p394 = scmp.ne.s32.totalorder %s383, %s384
      %p395 = scmp.eq.s32.totalorder %s49, 0
      %p396 = por %p394, %p395
      %p397 = scmp.ne.s32.totalorder %s383, %s384
      %p398 = scmp.eq.s32.totalorder %s50, 3
      %p399 = por %p397, %p398
      %p401 = scmp.ne.s32.totalorder %s384, %s400
      %p402 = scmp.eq.s32.totalorder %s50, 0
      %p403 = por %p401, %p402
      %s405 = sadd.s32 %s404, 1
      %p408 = scmp.eq.s32.totalorder %s44, 3
      %p409 = scmp.ne.s32.totalorder %s404, %s406
      %p410 = scmp.eq.s32.totalorder %s44, 0
      %p411 = por %p409, %p410
      %p412 = scmp.ne.s32.totalorder %s404, %s406
      %p413 = scmp.eq.s32.totalorder %s49, 3
      %p414 = por %p412, %p413
      %p415 = scmp.ne.s32.totalorder %s406, %s407
      %p416 = scmp.eq.s32.totalorder %s49, 0
      %p417 = por %p415, %p416
      %p418 = scmp.ne.s32.totalorder %s406, %s407
      %p419 = scmp.eq.s32.totalorder %s50, 3
      %p420 = por %p418, %p419
      %p422 = scmp.ne.s32.totalorder %s407, %s421
      %p423 = scmp.eq.s32.totalorder %s50, 0
      %p424 = por %p422, %p423
      %s426 = sadd.s32 %s425, 1
      %p429 = scmp.eq.s32.totalorder %s44, 3
      %p430 = scmp.ne.s32.totalorder %s425, %s427
      %p431 = scmp.eq.s32.totalorder %s44, 0
      %p432 = por %p430, %p431
      %p433 = scmp.ne.s32.totalorder %s425, %s427
      %p434 = scmp.eq.s32.totalorder %s49, 3
      %p435 = por %p433, %p434
      %p436 = scmp.ne.s32.totalorder %s427, %s428
      %p437 = scmp.eq.s32.totalorder %s49, 0
      %p438 = por %p436, %p437
      %p439 = scmp.ne.s32.totalorder %s427, %s428
      %p440 = scmp.eq.s32.totalorder %s50, 3
      %p441 = por %p439, %p440
      %p443 = scmp.ne.s32.totalorder %s428, %s442
      %p444 = scmp.eq.s32.totalorder %s50, 0
      %p445 = por %p443, %p444
      %s446 = ssub.s32 %s51, %s63
      %s447 = ssub.s32 %s52, %s59
      %s448 = sor.u32 %s446, %s447
      %p449 = scmp.eq.s32.totalorder %s448, 0
      %s451 = sadd.s32 %s450, 1
      %s452 = scalar_select %p449, %s450, %s451
      %p455 = pneg %p449
      %p456 = scmp.eq.s32.totalorder %s44, 3
      %p457 = por %p455, %p456
      %p458 = scmp.ne.s32.totalorder %s450, %s453
      %p459 = scmp.eq.s32.totalorder %s44, 0
      %p460 = por %p458, %p459
      %p461 = scmp.ne.s32.totalorder %s450, %s453
      %p462 = scmp.eq.s32.totalorder %s49, 3
      %p463 = por %p461, %p462
      %p464 = scmp.ne.s32.totalorder %s453, %s454
      %p465 = scmp.eq.s32.totalorder %s49, 0
      %p466 = por %p464, %p465
      %p467 = scmp.ne.s32.totalorder %s453, %s454
      %p468 = scmp.eq.s32.totalorder %s50, 3
      %p469 = por %p467, %p468
      %p471 = scmp.ne.s32.totalorder %s454, %s470
      %p472 = scmp.eq.s32.totalorder %s50, 0
      %p473 = por %p471, %p472
      %s474 = ssub.s32 %s51, %s63
      %s475 = ssub.s32 %s52, %s59
      %s476 = sor.u32 %s474, %s475
      %p477 = scmp.eq.s32.totalorder %s476, 0
      %s479 = sadd.s32 %s478, 1
      %s480 = scalar_select %p477, %s478, %s479
      %p483 = pneg %p477
      %p484 = scmp.eq.s32.totalorder %s44, 3
      %p485 = por %p483, %p484
      %p486 = scmp.ne.s32.totalorder %s478, %s481
      %p487 = scmp.eq.s32.totalorder %s44, 0
      %p488 = por %p486, %p487
      %p489 = scmp.ne.s32.totalorder %s478, %s481
      %p490 = scmp.eq.s32.totalorder %s49, 3
      %p491 = por %p489, %p490
      %p492 = scmp.ne.s32.totalorder %s481, %s482
      %p493 = scmp.eq.s32.totalorder %s49, 0
      %p494 = por %p492, %p493
      %p495 = scmp.ne.s32.totalorder %s481, %s482
      %p496 = scmp.eq.s32.totalorder %s50, 3
      %p497 = por %p495, %p496
      %p499 = scmp.ne.s32.totalorder %s482, %s498
      %p500 = scmp.eq.s32.totalorder %s50, 0
      %p501 = por %p499, %p500
      %p502 = scmp.le.s32.totalorder 1, %s44
      %p503 = scmp.lt.s32.totalorder %s44, 5
      %p504 = pnand %p502, %p503
      %p505 = pneg %p504
      // Predicated region
      $region9: #{tpu_custom_call.1} parent=5 // pred_check
        _
      $region10: #{tpu_custom_call.1} parent=5 // pred_check_branch
        %507 = sbr.rel (%p504) target = $region12
      $region11: #{tpu_custom_call.1} parent=5 // pred_region
        %s508 = ssub.s32 %s44, 1
        // Predicated region
        $region13: #{tpu_custom_call.1} parent=11 // pred_check
          %p509 = pneg %p417
        $region14: #{tpu_custom_call.1} parent=11 // pred_check_branch
          %511 = sbr.rel (%p509) target = $region16
        $region15: #{tpu_custom_call.1} parent=11 // pred_region
          _
        $region16: #{tpu_custom_call.1} parent=11 // pred_fallthru
          _
        // Predicated region
        $region17: #{tpu_custom_call.1} parent=11 // pred_check
          %p512 = pneg %p438
        $region18: #{tpu_custom_call.1} parent=11 // pred_check_branch
          %514 = sbr.rel (%p512) target = $region20
        $region19: #{tpu_custom_call.1} parent=11 // pred_region
          _
        $region20: #{tpu_custom_call.1} parent=11 // pred_fallthru
          _
      $region12: #{tpu_custom_call.1} parent=5 // pred_fallthru
        _
      %p515 = scmp.lt.s32.totalorder %s44, 4
      // Predicated region
      $region21: #{tpu_custom_call.1} parent=5 // pred_check
        %p516 = pneg %p515
      $region22: #{tpu_custom_call.1} parent=5 // pred_check_branch
        %518 = sbr.rel (%p516) target = $region24
      $region23: #{tpu_custom_call.1} parent=5 // pred_region
        // Predicated region
        $region25: #{tpu_custom_call.1} parent=23 // pred_check
          %p519 = pneg %p78
        $region26: #{tpu_custom_call.1} parent=23 // pred_check_branch
          %521 = sbr.rel (%p519) target = $region28
        $region27: #{tpu_custom_call.1} parent=23 // pred_region
          %s522 = sand.u32 %s68, 1
          %s523 = scalar_lea.sflag [#allocation3], %s522
          %s524 = sand.u32 %s68, 1
          %s525 = smul.addr %s524, 4
          %s526 = scalar_lea.vmem [#allocation2], %s525
          %s528 = ssub.s32 64, 64
          %529 = vsyncadd %s523, %s528
          %s530 = sadd.s32 %s52, %s51
          %s531 = smul.addr %s530, 64
          %s532 = scalar_lea.hbm %s0, %s531
          %s534 = sshll.u32 %s526, 4
          %s535 = int_to_ptr.vmem [resolvable:$true] %s534
          %537 = dma.hbm_to_vmem [thread:$0]  %s532, 64, %s535, %s523
        $region28: #{tpu_custom_call.1} parent=23 // pred_fallthru
          _
        // Predicated region
        $region29: #{tpu_custom_call.1} parent=23 // pred_check
          %p538 = pneg %p104
        $region30: #{tpu_custom_call.1} parent=23 // pred_check_branch
          %540 = sbr.rel (%p538) target = $region32
        $region31: #{tpu_custom_call.1} parent=23 // pred_region
          %s541 = sand.u32 %s44, 1
          %s542 = scalar_lea.sflag [#allocation6], %s541
          %s543 = sand.u32 %s94, 1
          %s544 = smul.addr %s543, 64
          %s545 = scalar_lea.vmem [#allocation5], %s544
          %s547 = ssub.s32 1024, 1024
          %548 = vsyncadd %s542, %s547
          %s549 = smul.addr %s51, 16
          %s550 = smul.addr %s549, 64
          %s551 = scalar_lea.hbm %s1, %s550
          %s552 = sshll.u32 %s545, 4
          %s553 = int_to_ptr.vmem [resolvable:$true] %s552
          %558 = dma.hbm_to_vmem [thread:$0]  %s551, 1024, %s553, %s542, 64, 64, 4
        $region32: #{tpu_custom_call.1} parent=23 // pred_fallthru
          _
        // Predicated region
        $region33: #{tpu_custom_call.1} parent=23 // pred_check
          %p559 = pneg %p130
        $region34: #{tpu_custom_call.1} parent=23 // pred_check_branch
          %561 = sbr.rel (%p559) target = $region36
        $region35: #{tpu_custom_call.1} parent=23 // pred_region
          %s562 = sand.u32 %s44, 1
          %s563 = scalar_lea.sflag [#allocation6], %s562
          %s564 = sand.u32 %s120, 1
          %s565 = scalar_lea.vmem [#allocation7], %s564
          %s567 = ssub.s32 16, 16
          %568 = vsyncadd %s563, %s567
          %s569 = smul.addr %s51, 16
          %s570 = scalar_lea.hbm %s2, %s569
          %s572 = sshll.u32 %s565, 4
          %s573 = int_to_ptr.vmem [resolvable:$true] %s572
          %575 = dma.hbm_to_vmem [thread:$0]  %s570, 16, %s573, %s563
        $region36: #{tpu_custom_call.1} parent=23 // pred_fallthru
          _
        // Predicated region
        $region37: #{tpu_custom_call.1} parent=23 // pred_check
          %p576 = pneg %p156
        $region38: #{tpu_custom_call.1} parent=23 // pred_check_branch
          %578 = sbr.rel (%p576) target = $region40
        $region39: #{tpu_custom_call.1} parent=23 // pred_region
          %s579 = sand.u32 %s44, 1
          %s580 = scalar_lea.sflag [#allocation9], %s579
          %s581 = sand.u32 %s146, 1
          %s582 = smul.addr %s581, 64
          %s583 = scalar_lea.vmem [#allocation8], %s582
          %s585 = ssub.s32 1024, 1024
          %586 = vsyncadd %s580, %s585
          %s587 = smul.addr %s51, 16
          %s588 = smul.addr %s587, 64
          %s589 = scalar_lea.hbm %s3, %s588
          %s590 = sshll.u32 %s583, 4
          %s591 = int_to_ptr.vmem [resolvable:$true] %s590
          %596 = dma.hbm_to_vmem [thread:$0]  %s589, 1024, %s591, %s580, 64, 64, 4
        $region40: #{tpu_custom_call.1} parent=23 // pred_fallthru
          _
        // Predicated region
        $region41: #{tpu_custom_call.1} parent=23 // pred_check
          %p597 = pneg %p182
        $region42: #{tpu_custom_call.1} parent=23 // pred_check_branch
          %599 = sbr.rel (%p597) target = $region44
        $region43: #{tpu_custom_call.1} parent=23 // pred_region
          %p600 = scmp.lt.s32.totalorder %s51, 3
          %s601 = scalar_select %p600, %s51, 3
          %s602 = scalar_lea.vmem %s4, %s601
        $region44: #{tpu_custom_call.1} parent=23 // pred_fallthru
          _
        // Predicated region
        $region45: #{tpu_custom_call.1} parent=23 // pred_check
          %p603 = pneg %p208
        $region46: #{tpu_custom_call.1} parent=23 // pred_check_branch
          %605 = sbr.rel (%p603) target = $region48
        $region47: #{tpu_custom_call.1} parent=23 // pred_region
          %s606 = sand.u32 %s44, 1
          %s607 = scalar_lea.sflag [#allocation9], %s606
          %s608 = sand.u32 %s198, 1
          %s609 = smul.addr %s608, 64
          %s610 = scalar_lea.vmem [#allocation10], %s609
          %s612 = ssub.s32 1024, 1024
          %613 = vsyncadd %s607, %s612
          %s614 = smul.addr %s51, 16
          %s615 = smul.addr %s614, 64
          %s616 = scalar_lea.hbm %s5, %s615
          %s617 = sshll.u32 %s610, 4
          %s618 = int_to_ptr.vmem [resolvable:$true] %s617
          %623 = dma.hbm_to_vmem [thread:$0]  %s616, 1024, %s618, %s607, 64, 64, 4
        $region48: #{tpu_custom_call.1} parent=23 // pred_fallthru
          _
        // Predicated region
        $region49: #{tpu_custom_call.1} parent=23 // pred_check
          %p624 = pneg %p234
        $region50: #{tpu_custom_call.1} parent=23 // pred_check_branch
          %626 = sbr.rel (%p624) target = $region52
        $region51: #{tpu_custom_call.1} parent=23 // pred_region
          %p627 = scmp.lt.s32.totalorder %s51, 3
          %s628 = scalar_select %p627, %s51, 3
          %s629 = scalar_lea.vmem %s6, %s628
        $region52: #{tpu_custom_call.1} parent=23 // pred_fallthru
          _
        // Predicated region
        $region53: #{tpu_custom_call.1} parent=23 // pred_check
          %p630 = pneg %p260
        $region54: #{tpu_custom_call.1} parent=23 // pred_check_branch
          %632 = sbr.rel (%p630) target = $region56
        $region55: #{tpu_custom_call.1} parent=23 // pred_region
          %s633 = sand.u32 %s44, 1
          %s634 = scalar_lea.sflag [#allocation12], %s633
          %s635 = sand.u32 %s250, 1
          %s636 = smul.addr %s635, 64
          %s637 = scalar_lea.vmem [#allocation11], %s636
          %s639 = ssub.s32 1024, 1024
          %640 = vsyncadd %s634, %s639
          %s641 = smul.addr %s51, 16
          %s642 = smul.addr %s641, 64
          %s643 = scalar_lea.hbm %s7, %s642
          %s644 = sshll.u32 %s637, 4
          %s645 = int_to_ptr.vmem [resolvable:$true] %s644
          %650 = dma.hbm_to_vmem [thread:$0]  %s643, 1024, %s645, %s634, 64, 64, 4
        $region56: #{tpu_custom_call.1} parent=23 // pred_fallthru
          _
        // Predicated region
        $region57: #{tpu_custom_call.1} parent=23 // pred_check
          %p651 = pneg %p286
        $region58: #{tpu_custom_call.1} parent=23 // pred_check_branch
          %653 = sbr.rel (%p651) target = $region60
        $region59: #{tpu_custom_call.1} parent=23 // pred_region
          %p654 = scmp.lt.s32.totalorder %s51, 3
          %s655 = scalar_select %p654, %s51, 3
          %s656 = scalar_lea.vmem %s8, %s655
        $region60: #{tpu_custom_call.1} parent=23 // pred_fallthru
          _
        // Predicated region
        $region61: #{tpu_custom_call.1} parent=23 // pred_check
          %p657 = pneg %p312
        $region62: #{tpu_custom_call.1} parent=23 // pred_check_branch
          %659 = sbr.rel (%p657) target = $region64
        $region63: #{tpu_custom_call.1} parent=23 // pred_region
          %s660 = sand.u32 %s44, 1
          %s661 = scalar_lea.sflag [#allocation12], %s660
          %s662 = sand.u32 %s302, 1
          %s663 = smul.addr %s662, 64
          %s664 = scalar_lea.vmem [#allocation13], %s663
          %s666 = ssub.s32 1024, 1024
          %667 = vsyncadd %s661, %s666
          %s668 = smul.addr %s51, 16
          %s669 = smul.addr %s668, 64
          %s670 = scalar_lea.hbm %s9, %s669
          %s671 = sshll.u32 %s664, 4
          %s672 = int_to_ptr.vmem [resolvable:$true] %s671
          %677 = dma.hbm_to_vmem [thread:$0]  %s670, 1024, %s672, %s661, 64, 64, 4
        $region64: #{tpu_custom_call.1} parent=23 // pred_fallthru
          _
        // Predicated region
        $region65: #{tpu_custom_call.1} parent=23 // pred_check
          %p678 = pneg %p338
        $region66: #{tpu_custom_call.1} parent=23 // pred_check_branch
          %680 = sbr.rel (%p678) target = $region68
        $region67: #{tpu_custom_call.1} parent=23 // pred_region
          %p681 = scmp.lt.s32.totalorder %s51, 3
          %s682 = scalar_select %p681, %s51, 3
          %s683 = scalar_lea.vmem %s10, %s682
        $region68: #{tpu_custom_call.1} parent=23 // pred_fallthru
          _
        // Predicated region
        $region69: #{tpu_custom_call.1} parent=23 // pred_check
          %p684 = pneg %p364
        $region70: #{tpu_custom_call.1} parent=23 // pred_check_branch
          %686 = sbr.rel (%p684) target = $region72
        $region71: #{tpu_custom_call.1} parent=23 // pred_region
          %s687 = sand.u32 %s354, 1
          %s688 = scalar_lea.sflag [#allocation15], %s687
          %s689 = sand.u32 %s354, 1
          %s690 = smul.addr %s689, 64
          %s691 = scalar_lea.vmem [#allocation14], %s690
          %s693 = ssub.s32 1024, 1024
          %694 = vsyncadd %s688, %s693
          %s695 = smul.addr %s51, 16
          %s696 = smul.addr %s695, 64
          %s697 = scalar_lea.hbm %s11, %s696
          %s698 = sshll.u32 %s691, 4
          %s699 = int_to_ptr.vmem [resolvable:$true] %s698
          %704 = dma.hbm_to_vmem [thread:$0]  %s697, 1024, %s699, %s688, 64, 64, 4
        $region72: #{tpu_custom_call.1} parent=23 // pred_fallthru
          _
        // Predicated region
        $region73: #{tpu_custom_call.1} parent=23 // pred_check
          %p705 = pneg %p390
        $region74: #{tpu_custom_call.1} parent=23 // pred_check_branch
          %707 = sbr.rel (%p705) target = $region76
        $region75: #{tpu_custom_call.1} parent=23 // pred_region
          %p708 = scmp.lt.s32.totalorder %s51, 3
          %s709 = scalar_select %p708, %s51, 3
          %s710 = scalar_lea.vmem %s12, %s709
        $region76: #{tpu_custom_call.1} parent=23 // pred_fallthru
          _
      $region24: #{tpu_custom_call.1} parent=5 // pred_fallthru
        _
      %p711 = scmp.le.s32.totalorder 1, %s44
      %p712 = scmp.lt.s32.totalorder %s44, 5
      %p713 = pnand %p711, %p712
      %p714 = pneg %p713
      // Predicated region
      $region77: #{tpu_custom_call.1} parent=5 // pred_check
        _
      $region78: #{tpu_custom_call.1} parent=5 // pred_check_branch
        %716 = sbr.rel (%p713) target = $region80
      $region79: #{tpu_custom_call.1} parent=5 // pred_region
        %s717 = ssub.s32 %s44, 1
        %s718 = sand.u32 %s71, 1
        %s719 = scalar_lea.sflag [#allocation3], %s718
        %s720 = sand.u32 %s71, 1
        %s721 = smul.addr %s720, 4
        %s722 = scalar_lea.vmem [#allocation2], %s721
        // Predicated region
        $region81: #{tpu_custom_call.1} parent=79 // pred_check
          %p723 = pneg %p84
        $region82: #{tpu_custom_call.1} parent=79 // pred_check_branch
          %725 = sbr.rel (%p723) target = $region84
        $region83: #{tpu_custom_call.1} parent=79 // pred_region
          %726 = dma.done %s719, 64
        $region84: #{tpu_custom_call.1} parent=79 // pred_fallthru
          _
        %s727 = sand.u32 %s49, 1
        %s728 = scalar_lea.sflag [#allocation6], %s727
        %s729 = sand.u32 %s97, 1
        %s730 = smul.addr %s729, 64
        %s731 = scalar_lea.vmem [#allocation5], %s730
        // Predicated region
        $region85: #{tpu_custom_call.1} parent=79 // pred_check
          %p732 = pneg %p110
        $region86: #{tpu_custom_call.1} parent=79 // pred_check_branch
          %734 = sbr.rel (%p732) target = $region88
        $region87: #{tpu_custom_call.1} parent=79 // pred_region
          %735 = dma.done %s728, 1024
        $region88: #{tpu_custom_call.1} parent=79 // pred_fallthru
          _
        %s736 = sand.u32 %s49, 1
        %s737 = scalar_lea.sflag [#allocation6], %s736
        %s738 = sand.u32 %s123, 1
        %s739 = scalar_lea.vmem [#allocation7], %s738
        // Predicated region
        $region89: #{tpu_custom_call.1} parent=79 // pred_check
          %p740 = pneg %p136
        $region90: #{tpu_custom_call.1} parent=79 // pred_check_branch
          %742 = sbr.rel (%p740) target = $region92
        $region91: #{tpu_custom_call.1} parent=79 // pred_region
          %743 = dma.done %s737, 16
        $region92: #{tpu_custom_call.1} parent=79 // pred_fallthru
          _
        %s744 = sand.u32 %s49, 1
        %s745 = scalar_lea.sflag [#allocation9], %s744
        %s746 = sand.u32 %s149, 1
        %s747 = smul.addr %s746, 64
        %s748 = scalar_lea.vmem [#allocation8], %s747
        // Predicated region
        $region93: #{tpu_custom_call.1} parent=79 // pred_check
          %p749 = pneg %p162
        $region94: #{tpu_custom_call.1} parent=79 // pred_check_branch
          %751 = sbr.rel (%p749) target = $region96
        $region95: #{tpu_custom_call.1} parent=79 // pred_region
          %752 = dma.done %s745, 1024
        $region96: #{tpu_custom_call.1} parent=79 // pred_fallthru
          _
        %s753 = sand.u32 %s49, 1
        %s754 = scalar_lea.sflag [#allocation9], %s753
        %s755 = sand.u32 %s201, 1
        %s756 = smul.addr %s755, 64
        %s757 = scalar_lea.vmem [#allocation10], %s756
        // Predicated region
        $region97: #{tpu_custom_call.1} parent=79 // pred_check
          %p758 = pneg %p214
        $region98: #{tpu_custom_call.1} parent=79 // pred_check_branch
          %760 = sbr.rel (%p758) target = $region100
        $region99: #{tpu_custom_call.1} parent=79 // pred_region
          %761 = dma.done %s754, 1024
        $region100: #{tpu_custom_call.1} parent=79 // pred_fallthru
          _
        %s762 = sand.u32 %s49, 1
        %s763 = scalar_lea.sflag [#allocation12], %s762
        %s764 = sand.u32 %s253, 1
        %s765 = smul.addr %s764, 64
        %s766 = scalar_lea.vmem [#allocation11], %s765
        // Predicated region
        $region101: #{tpu_custom_call.1} parent=79 // pred_check
          %p767 = pneg %p266
        $region102: #{tpu_custom_call.1} parent=79 // pred_check_branch
          %769 = sbr.rel (%p767) target = $region104
        $region103: #{tpu_custom_call.1} parent=79 // pred_region
          %770 = dma.done %s763, 1024
        $region104: #{tpu_custom_call.1} parent=79 // pred_fallthru
          _
        %s771 = sand.u32 %s49, 1
        %s772 = scalar_lea.sflag [#allocation12], %s771
        %s773 = sand.u32 %s305, 1
        %s774 = smul.addr %s773, 64
        %s775 = scalar_lea.vmem [#allocation13], %s774
        // Predicated region
        $region105: #{tpu_custom_call.1} parent=79 // pred_check
          %p776 = pneg %p318
        $region106: #{tpu_custom_call.1} parent=79 // pred_check_branch
          %778 = sbr.rel (%p776) target = $region108
        $region107: #{tpu_custom_call.1} parent=79 // pred_region
          %779 = dma.done %s772, 1024
        $region108: #{tpu_custom_call.1} parent=79 // pred_fallthru
          _
        %s780 = sand.u32 %s357, 1
        %s781 = scalar_lea.sflag [#allocation15], %s780
        %s782 = sand.u32 %s357, 1
        %s783 = smul.addr %s782, 64
        %s784 = scalar_lea.vmem [#allocation14], %s783
        // Predicated region
        $region109: #{tpu_custom_call.1} parent=79 // pred_check
          %p785 = pneg %p370
        $region110: #{tpu_custom_call.1} parent=79 // pred_check_branch
          %787 = sbr.rel (%p785) target = $region112
        $region111: #{tpu_custom_call.1} parent=79 // pred_region
          %788 = dma.done %s781, 1024
        $region112: #{tpu_custom_call.1} parent=79 // pred_fallthru
          _
        %s789 = sand.u32 %s71, 1
        %s790 = scalar_lea.sflag [#allocation3], %s789
        %s791 = sand.u32 %s71, 1
        %s792 = smul.addr %s791, 4
        %s793 = scalar_lea.vmem [#allocation2], %s792
        %p794 = pneg %p84
        %p795 = pneg %p81
        %s796 = sand.u32 %s49, 1
        %s797 = scalar_lea.sflag [#allocation6], %s796
        %s798 = sand.u32 %s97, 1
        %s799 = smul.addr %s798, 64
        %s800 = scalar_lea.vmem [#allocation5], %s799
        %p801 = pneg %p110
        %p802 = pneg %p107
        %s803 = sand.u32 %s49, 1
        %s804 = scalar_lea.sflag [#allocation6], %s803
        %s805 = sand.u32 %s123, 1
        %s806 = scalar_lea.vmem [#allocation7], %s805
        %p807 = pneg %p136
        %p808 = pneg %p133
        %s809 = sand.u32 %s49, 1
        %s810 = scalar_lea.sflag [#allocation9], %s809
        %s811 = sand.u32 %s149, 1
        %s812 = smul.addr %s811, 64
        %s813 = scalar_lea.vmem [#allocation8], %s812
        %p814 = pneg %p162
        %p815 = pneg %p159
        %p816 = scmp.lt.s32.totalorder %s53, 3
        %s817 = scalar_select %p816, %s53, 3
        %s818 = scalar_lea.vmem %s4, %s817
        %p819 = pneg %p188
        %p820 = pneg %p185
        %s821 = sand.u32 %s49, 1
        %s822 = scalar_lea.sflag [#allocation9], %s821
        %s823 = sand.u32 %s201, 1
        %s824 = smul.addr %s823, 64
        %s825 = scalar_lea.vmem [#allocation10], %s824
        %p826 = pneg %p214
        %p827 = pneg %p211
        %p828 = scmp.lt.s32.totalorder %s53, 3
        %s829 = scalar_select %p828, %s53, 3
        %s830 = scalar_lea.vmem %s6, %s829
        %p831 = pneg %p240
        %p832 = pneg %p237
        %s833 = sand.u32 %s49, 1
        %s834 = scalar_lea.sflag [#allocation12], %s833
        %s835 = sand.u32 %s253, 1
        %s836 = smul.addr %s835, 64
        %s837 = scalar_lea.vmem [#allocation11], %s836
        %p838 = pneg %p266
        %p839 = pneg %p263
        %p840 = scmp.lt.s32.totalorder %s53, 3
        %s841 = scalar_select %p840, %s53, 3
        %s842 = scalar_lea.vmem %s8, %s841
        %p843 = pneg %p292
        %p844 = pneg %p289
        %s845 = sand.u32 %s49, 1
        %s846 = scalar_lea.sflag [#allocation12], %s845
        %s847 = sand.u32 %s305, 1
        %s848 = smul.addr %s847, 64
        %s849 = scalar_lea.vmem [#allocation13], %s848
        %p850 = pneg %p318
        %p851 = pneg %p315
        %p852 = scmp.lt.s32.totalorder %s53, 3
        %s853 = scalar_select %p852, %s53, 3
        %s854 = scalar_lea.vmem %s10, %s853
        %p855 = pneg %p344
        %p856 = pneg %p341
        %s857 = sand.u32 %s357, 1
        %s858 = scalar_lea.sflag [#allocation15], %s857
        %s859 = sand.u32 %s357, 1
        %s860 = smul.addr %s859, 64
        %s861 = scalar_lea.vmem [#allocation14], %s860
        %p862 = pneg %p370
        %p863 = pneg %p367
        %p864 = scmp.lt.s32.totalorder %s53, 3
        %s865 = scalar_select %p864, %s53, 3
        %s866 = scalar_lea.vmem %s12, %s865
        %p867 = pneg %p396
        %p868 = pneg %p393
        %p869 = pneg %p417
        %p870 = pneg %p414
        %p871 = pneg %p438
        %p872 = pneg %p435
        %p873 = pneg %p466
        %p874 = pneg %p463
        %s875 = sand.u32 %s453, 1
        %s876 = scalar_lea.sflag [#allocation4], %s875
        %s877 = sand.u32 %s453, 1
        %s878 = smul.addr %s877, 8
        %s879 = scalar_lea.vmem [#allocation16], %s878
        %p880 = pneg %p494
        %p881 = pneg %p491
        %s882 = sand.u32 %s481, 1
        %s883 = scalar_lea.sflag [#allocation18], %s882
        %s884 = sand.u32 %s481, 1
        %s885 = smul.addr %s884, 8
        %s886 = scalar_lea.vmem [#allocation17], %s885
        %p887 = scmp.lt.s32.totalorder %s53, 3
        %s888 = scalar_select %p887, %s53, 3
        %s889 = scalar_lea.vmem %s4, %s888
        %p890 = scmp.lt.s32.totalorder %s53, 3
        %s891 = scalar_select %p890, %s53, 3
        %s892 = scalar_lea.vmem %s6, %s891
        %p893 = scmp.lt.s32.totalorder %s53, 3
        %s894 = scalar_select %p893, %s53, 3
        %s895 = scalar_lea.vmem %s8, %s894
        %p896 = scmp.lt.s32.totalorder %s53, 3
        %s897 = scalar_select %p896, %s53, 3
        %s898 = scalar_lea.vmem %s10, %s897
        %p899 = scmp.lt.s32.totalorder %s53, 3
        %s900 = scalar_select %p899, %s53, 3
        %s901 = scalar_lea.vmem %s12, %s900
        %v903 = vld [vmem:[%s722] sm:$0xf]
        %v904 = vld [vmem:[%s731] sm:$0xf]
        %v905 = vld [vmem:[%s731 + $0x4] sm:$0xf]
        %v906 = vld [vmem:[%s731 + $0x8] sm:$0xf]
        %v907 = vld [vmem:[%s731 + $0xc] sm:$0xf]
        %v908 = vld [vmem:[%s731 + $0x10] sm:$0xf]
        %v909 = vld [vmem:[%s731 + $0x14] sm:$0xf]
        %v910 = vld [vmem:[%s731 + $0x18] sm:$0xf]
        %v911 = vld [vmem:[%s731 + $0x1c] sm:$0xf]
        %v912 = vld [vmem:[%s731 + $0x20] sm:$0xf]
        %v913 = vld [vmem:[%s731 + $0x24] sm:$0xf]
        %v914 = vld [vmem:[%s731 + $0x28] sm:$0xf]
        %v915 = vld [vmem:[%s731 + $0x2c] sm:$0xf]
        %v916 = vld [vmem:[%s731 + $0x30] sm:$0xf]
        %v917 = vld [vmem:[%s731 + $0x34] sm:$0xf]
        %v918 = vld [vmem:[%s731 + $0x38] sm:$0xf]
        %v919 = vld [vmem:[%s731 + $0x3c] sm:$0xf]
        %v920 = vld [vmem:[%s739] sm:$0x1]
        %v922 = vlaneseq
        %v923 = vshrl.u32 %v922, 7
        %v924 = vsub.s32 0, %v923
        %v925 = vrot.slane %v920, %v924
        %v943 = vunpack.c.l.b16 %v904
        %v944 = vunpack.c.l.b16 %v905
        %v945 = vunpack.c.l.b16 %v906
        %v946 = vunpack.c.l.b16 %v907
        %v947 = vunpack.c.l.b16 %v908
        %v948 = vunpack.c.l.b16 %v909
        %v949 = vunpack.c.l.b16 %v910
        %v950 = vunpack.c.l.b16 %v911
        %v951 = vunpack.c.l.b16 %v912
        %v952 = vunpack.c.l.b16 %v913
        %v953 = vunpack.c.l.b16 %v914
        %v954 = vunpack.c.l.b16 %v915
        %v955 = vunpack.c.l.b16 %v916
        %v956 = vunpack.c.l.b16 %v917
        %v957 = vunpack.c.l.b16 %v918
        %v958 = vunpack.c.l.b16 %v919
        %v959 = vpack.c.b16 %v944, %v943
        %v960 = vpack.c.b16 %v946, %v945
        %v961 = vpack.c.b16 %v948, %v947
        %v962 = vpack.c.b16 %v950, %v949
        %v963 = vpack.c.b16 %v952, %v951
        %v964 = vpack.c.b16 %v954, %v953
        %v965 = vpack.c.b16 %v956, %v955
        %v966 = vpack.c.b16 %v958, %v957
        %975 = vmatprep.subr.bf16.mxu0 0
        %976 = vmatpush1.bf16.msra.mxu0 %v966
        %977 = vmatprep.subr.bf16.mxu0 0
        %978 = vmatpush1.bf16.msra.mxu0 %v965
        %979 = vmatprep.subr.bf16.mxu0 0
        %980 = vmatpush1.bf16.msra.mxu0 %v964
        %981 = vmatprep.subr.bf16.mxu0 0
        %982 = vmatpush1.bf16.msra.mxu0 %v963
        %983 = vmatprep.subr.bf16.mxu0 0
        %984 = vmatpush1.bf16.msra.mxu0 %v962
        %985 = vmatprep.subr.bf16.mxu0 0
        %986 = vmatpush1.bf16.msra.mxu0 %v961
        %987 = vmatprep.subr.bf16.mxu0 0
        %988 = vmatpush1.bf16.msra.mxu0 %v960
        %989 = vmatprep.subr.bf16.mxu0 0
        %990 = vmatpush1.bf16.msra.mxu0 %v959
        %991 = vmatprep.subr.bf16.mxu0 0
        %992 = vmatpush2.bf16.msra.mxu0 0
        %993 = vmatprep.subr.bf16.mxu0 0
        %994 = vmatpush2.bf16.msra.mxu0 0
        %995 = vmatprep.subr.bf16.mxu0 0
        %996 = vmatpush2.bf16.msra.mxu0 0
        %997 = vmatprep.subr.bf16.mxu0 0
        %998 = vmatpush2.bf16.msra.mxu0 0
        %999 = vmatprep.subr.bf16.mxu0 0
        %1000 = vmatpush2.bf16.msra.mxu0 0
        %1001 = vmatprep.subr.bf16.mxu0 0
        %1002 = vmatpush2.bf16.msra.mxu0 0
        %1003 = vmatprep.subr.bf16.mxu0 0
        %1004 = vmatpush2.bf16.msra.mxu0 0
        %1005 = vmatprep.subr.bf16.mxu0 0
        %1006 = vmatpush2.bf16.msra.mxu0 0
        %1007 = vmatprep.mubr.bf16.mxu0 0
        %1008 = vmatmul.mubr.bf16.gmra.mxu0 %v903
        %v1009 = vpop.f32.mrf.mxu0
        %v1010 = vadd.f32 %v925, %v1009
        %v1011 = vpop.f32.mrf.mxu0
        %v1012 = vpop.f32.mrf.mxu0
        %v1013 = vpop.f32.mrf.mxu0
        %1014 = vdwg.mxu0
        %v1015 = vxor.u32 %v1010, 2147483648
        %v1016 = vmul.f32 %v1015, 1.442695
        %v1017 = vpow.pop %v1016
        %v1018 = vadd.f32 %v1017, 1.0
        %v1019 = vrcp.pop %v1018
        %v1020 = vmul.f32 1.0, %v1019
        %v1021 = vmul.f32 %v1010, %v1020
        %v1022 = vpack.c.bf16 %v1021, %v1021
        %v1023 = vld [vmem:[%s748] sm:$0xf]
        %v1024 = vld [vmem:[%s748 + $0x4] sm:$0xf]
        %v1025 = vld [vmem:[%s748 + $0x8] sm:$0xf]
        %v1026 = vld [vmem:[%s748 + $0xc] sm:$0xf]
        %v1027 = vld [vmem:[%s748 + $0x10] sm:$0xf]
        %v1028 = vld [vmem:[%s748 + $0x14] sm:$0xf]
        %v1029 = vld [vmem:[%s748 + $0x18] sm:$0xf]
        %v1030 = vld [vmem:[%s748 + $0x1c] sm:$0xf]
        %v1031 = vld [vmem:[%s748 + $0x20] sm:$0xf]
        %v1032 = vld [vmem:[%s748 + $0x24] sm:$0xf]
        %v1033 = vld [vmem:[%s748 + $0x28] sm:$0xf]
        %v1034 = vld [vmem:[%s748 + $0x2c] sm:$0xf]
        %v1035 = vld [vmem:[%s748 + $0x30] sm:$0xf]
        %v1036 = vld [vmem:[%s748 + $0x34] sm:$0xf]
        %v1037 = vld [vmem:[%s748 + $0x38] sm:$0xf]
        %v1038 = vld [vmem:[%s748 + $0x3c] sm:$0xf]
        %v1039 = vld [vmem:[%s889] sm:$0x1]
        %v1041 = vlaneseq
        %v1042 = vshrl.u32 %v1041, 7
        %v1043 = vsub.s32 0, %v1042
        %v1044 = vrot.slane %v1039, %v1043
        %v1062 = vunpack.c.l.b16 %v1023
        %v1063 = vunpack.c.l.b16 %v1024
        %v1064 = vunpack.c.l.b16 %v1025
        %v1065 = vunpack.c.l.b16 %v1026
        %v1066 = vunpack.c.l.b16 %v1027
        %v1067 = vunpack.c.l.b16 %v1028
        %v1068 = vunpack.c.l.b16 %v1029
        %v1069 = vunpack.c.l.b16 %v1030
        %v1070 = vunpack.c.l.b16 %v1031
        %v1071 = vunpack.c.l.b16 %v1032
        %v1072 = vunpack.c.l.b16 %v1033
        %v1073 = vunpack.c.l.b16 %v1034
        %v1074 = vunpack.c.l.b16 %v1035
        %v1075 = vunpack.c.l.b16 %v1036
        %v1076 = vunpack.c.l.b16 %v1037
        %v1077 = vunpack.c.l.b16 %v1038
        %v1078 = vpack.c.b16 %v1063, %v1062
        %v1079 = vpack.c.b16 %v1065, %v1064
        %v1080 = vpack.c.b16 %v1067, %v1066
        %v1081 = vpack.c.b16 %v1069, %v1068
        %v1082 = vpack.c.b16 %v1071, %v1070
        %v1083 = vpack.c.b16 %v1073, %v1072
        %v1084 = vpack.c.b16 %v1075, %v1074
        %v1085 = vpack.c.b16 %v1077, %v1076
        %1094 = vmatprep.subr.bf16.mxu0 0
        %1095 = vmatpush1.bf16.msra.mxu0 %v1085
        %1096 = vmatprep.subr.bf16.mxu0 0
        %1097 = vmatpush1.bf16.msra.mxu0 %v1084
        %1098 = vmatprep.subr.bf16.mxu0 0
        %1099 = vmatpush1.bf16.msra.mxu0 %v1083
        %1100 = vmatprep.subr.bf16.mxu0 0
        %1101 = vmatpush1.bf16.msra.mxu0 %v1082
        %1102 = vmatprep.subr.bf16.mxu0 0
        %1103 = vmatpush1.bf16.msra.mxu0 %v1081
        %1104 = vmatprep.subr.bf16.mxu0 0
        %1105 = vmatpush1.bf16.msra.mxu0 %v1080
        %1106 = vmatprep.subr.bf16.mxu0 0
        %1107 = vmatpush1.bf16.msra.mxu0 %v1079
        %1108 = vmatprep.subr.bf16.mxu0 0
        %1109 = vmatpush1.bf16.msra.mxu0 %v1078
        %1110 = vmatprep.subr.bf16.mxu0 0
        %1111 = vmatpush2.bf16.msra.mxu0 0
        %1112 = vmatprep.subr.bf16.mxu0 0
        %1113 = vmatpush2.bf16.msra.mxu0 0
        %1114 = vmatprep.subr.bf16.mxu0 0
        %1115 = vmatpush2.bf16.msra.mxu0 0
        %1116 = vmatprep.subr.bf16.mxu0 0
        %1117 = vmatpush2.bf16.msra.mxu0 0
        %1118 = vmatprep.subr.bf16.mxu0 0
        %1119 = vmatpush2.bf16.msra.mxu0 0
        %1120 = vmatprep.subr.bf16.mxu0 0
        %1121 = vmatpush2.bf16.msra.mxu0 0
        %1122 = vmatprep.subr.bf16.mxu0 0
        %1123 = vmatpush2.bf16.msra.mxu0 0
        %1124 = vmatprep.subr.bf16.mxu0 0
        %1125 = vmatpush2.bf16.msra.mxu0 0
        %1126 = vmatprep.mubr.bf16.mxu0 0
        %1127 = vmatmul.mubr.bf16.gmra.mxu0 %v1022
        %v1128 = vpop.f32.mrf.mxu0
        %v1129 = vadd.f32 %v1044, %v1128
        %v1130 = vpop.f32.mrf.mxu0
        %v1131 = vpop.f32.mrf.mxu0
        %v1132 = vpop.f32.mrf.mxu0
        %1133 = vdwg.mxu0
        %v1134 = vxor.u32 %v1129, 2147483648
        %v1135 = vmul.f32 %v1134, 1.442695
        %v1136 = vpow.pop %v1135
        %v1137 = vadd.f32 %v1136, 1.0
        %v1138 = vrcp.pop %v1137
        %v1139 = vmul.f32 1.0, %v1138
        %v1140 = vmul.f32 %v1129, %v1139
        %v1141 = vpack.c.bf16 %v1140, %v1140
        %v1142 = vld [vmem:[%s757] sm:$0xf]
        %v1143 = vld [vmem:[%s757 + $0x4] sm:$0xf]
        %v1144 = vld [vmem:[%s757 + $0x8] sm:$0xf]
        %v1145 = vld [vmem:[%s757 + $0xc] sm:$0xf]
        %v1146 = vld [vmem:[%s757 + $0x10] sm:$0xf]
        %v1147 = vld [vmem:[%s757 + $0x14] sm:$0xf]
        %v1148 = vld [vmem:[%s757 + $0x18] sm:$0xf]
        %v1149 = vld [vmem:[%s757 + $0x1c] sm:$0xf]
        %v1150 = vld [vmem:[%s757 + $0x20] sm:$0xf]
        %v1151 = vld [vmem:[%s757 + $0x24] sm:$0xf]
        %v1152 = vld [vmem:[%s757 + $0x28] sm:$0xf]
        %v1153 = vld [vmem:[%s757 + $0x2c] sm:$0xf]
        %v1154 = vld [vmem:[%s757 + $0x30] sm:$0xf]
        %v1155 = vld [vmem:[%s757 + $0x34] sm:$0xf]
        %v1156 = vld [vmem:[%s757 + $0x38] sm:$0xf]
        %v1157 = vld [vmem:[%s757 + $0x3c] sm:$0xf]
        %v1158 = vld [vmem:[%s892] sm:$0x1]
        %v1160 = vlaneseq
        %v1161 = vshrl.u32 %v1160, 7
        %v1162 = vsub.s32 0, %v1161
        %v1163 = vrot.slane %v1158, %v1162
        %v1181 = vunpack.c.l.b16 %v1142
        %v1182 = vunpack.c.l.b16 %v1143
        %v1183 = vunpack.c.l.b16 %v1144
        %v1184 = vunpack.c.l.b16 %v1145
        %v1185 = vunpack.c.l.b16 %v1146
        %v1186 = vunpack.c.l.b16 %v1147
        %v1187 = vunpack.c.l.b16 %v1148
        %v1188 = vunpack.c.l.b16 %v1149
        %v1189 = vunpack.c.l.b16 %v1150
        %v1190 = vunpack.c.l.b16 %v1151
        %v1191 = vunpack.c.l.b16 %v1152
        %v1192 = vunpack.c.l.b16 %v1153
        %v1193 = vunpack.c.l.b16 %v1154
        %v1194 = vunpack.c.l.b16 %v1155
        %v1195 = vunpack.c.l.b16 %v1156
        %v1196 = vunpack.c.l.b16 %v1157
        %v1197 = vpack.c.b16 %v1182, %v1181
        %v1198 = vpack.c.b16 %v1184, %v1183
        %v1199 = vpack.c.b16 %v1186, %v1185
        %v1200 = vpack.c.b16 %v1188, %v1187
        %v1201 = vpack.c.b16 %v1190, %v1189
        %v1202 = vpack.c.b16 %v1192, %v1191
        %v1203 = vpack.c.b16 %v1194, %v1193
        %v1204 = vpack.c.b16 %v1196, %v1195
        %1213 = vmatprep.subr.bf16.mxu0 0
        %1214 = vmatpush1.bf16.msra.mxu0 %v1204
        %1215 = vmatprep.subr.bf16.mxu0 0
        %1216 = vmatpush1.bf16.msra.mxu0 %v1203
        %1217 = vmatprep.subr.bf16.mxu0 0
        %1218 = vmatpush1.bf16.msra.mxu0 %v1202
        %1219 = vmatprep.subr.bf16.mxu0 0
        %1220 = vmatpush1.bf16.msra.mxu0 %v1201
        %1221 = vmatprep.subr.bf16.mxu0 0
        %1222 = vmatpush1.bf16.msra.mxu0 %v1200
        %1223 = vmatprep.subr.bf16.mxu0 0
        %1224 = vmatpush1.bf16.msra.mxu0 %v1199
        %1225 = vmatprep.subr.bf16.mxu0 0
        %1226 = vmatpush1.bf16.msra.mxu0 %v1198
        %1227 = vmatprep.subr.bf16.mxu0 0
        %1228 = vmatpush1.bf16.msra.mxu0 %v1197
        %1229 = vmatprep.subr.bf16.mxu0 0
        %1230 = vmatpush2.bf16.msra.mxu0 0
        %1231 = vmatprep.subr.bf16.mxu0 0
        %1232 = vmatpush2.bf16.msra.mxu0 0
        %1233 = vmatprep.subr.bf16.mxu0 0
        %1234 = vmatpush2.bf16.msra.mxu0 0
        %1235 = vmatprep.subr.bf16.mxu0 0
        %1236 = vmatpush2.bf16.msra.mxu0 0
        %1237 = vmatprep.subr.bf16.mxu0 0
        %1238 = vmatpush2.bf16.msra.mxu0 0
        %1239 = vmatprep.subr.bf16.mxu0 0
        %1240 = vmatpush2.bf16.msra.mxu0 0
        %1241 = vmatprep.subr.bf16.mxu0 0
        %1242 = vmatpush2.bf16.msra.mxu0 0
        %1243 = vmatprep.subr.bf16.mxu0 0
        %1244 = vmatpush2.bf16.msra.mxu0 0
        %1245 = vmatprep.mubr.bf16.mxu0 0
        %1246 = vmatmul.mubr.bf16.gmra.mxu0 %v1141
        %v1247 = vpop.f32.mrf.mxu0
        %v1248 = vadd.f32 %v1163, %v1247
        %v1249 = vpop.f32.mrf.mxu0
        %v1250 = vpop.f32.mrf.mxu0
        %v1251 = vpop.f32.mrf.mxu0
        %1252 = vdwg.mxu0
        %v1253 = vxor.u32 %v1248, 2147483648
        %v1254 = vmul.f32 %v1253, 1.442695
        %v1255 = vpow.pop %v1254
        %v1256 = vadd.f32 %v1255, 1.0
        %v1257 = vrcp.pop %v1256
        %v1258 = vmul.f32 1.0, %v1257
        %v1259 = vmul.f32 %v1248, %v1258
        %v1260 = vpack.c.bf16 %v1259, %v1259
        %v1261 = vld [vmem:[%s766] sm:$0xf]
        %v1262 = vld [vmem:[%s766 + $0x4] sm:$0xf]
        %v1263 = vld [vmem:[%s766 + $0x8] sm:$0xf]
        %v1264 = vld [vmem:[%s766 + $0xc] sm:$0xf]
        %v1265 = vld [vmem:[%s766 + $0x10] sm:$0xf]
        %v1266 = vld [vmem:[%s766 + $0x14] sm:$0xf]
        %v1267 = vld [vmem:[%s766 + $0x18] sm:$0xf]
        %v1268 = vld [vmem:[%s766 + $0x1c] sm:$0xf]
        %v1269 = vld [vmem:[%s766 + $0x20] sm:$0xf]
        %v1270 = vld [vmem:[%s766 + $0x24] sm:$0xf]
        %v1271 = vld [vmem:[%s766 + $0x28] sm:$0xf]
        %v1272 = vld [vmem:[%s766 + $0x2c] sm:$0xf]
        %v1273 = vld [vmem:[%s766 + $0x30] sm:$0xf]
        %v1274 = vld [vmem:[%s766 + $0x34] sm:$0xf]
        %v1275 = vld [vmem:[%s766 + $0x38] sm:$0xf]
        %v1276 = vld [vmem:[%s766 + $0x3c] sm:$0xf]
        %v1277 = vld [vmem:[%s895] sm:$0x1]
        %v1279 = vlaneseq
        %v1280 = vshrl.u32 %v1279, 7
        %v1281 = vsub.s32 0, %v1280
        %v1282 = vrot.slane %v1277, %v1281
        %v1300 = vunpack.c.l.b16 %v1261
        %v1301 = vunpack.c.l.b16 %v1262
        %v1302 = vunpack.c.l.b16 %v1263
        %v1303 = vunpack.c.l.b16 %v1264
        %v1304 = vunpack.c.l.b16 %v1265
        %v1305 = vunpack.c.l.b16 %v1266
        %v1306 = vunpack.c.l.b16 %v1267
        %v1307 = vunpack.c.l.b16 %v1268
        %v1308 = vunpack.c.l.b16 %v1269
        %v1309 = vunpack.c.l.b16 %v1270
        %v1310 = vunpack.c.l.b16 %v1271
        %v1311 = vunpack.c.l.b16 %v1272
        %v1312 = vunpack.c.l.b16 %v1273
        %v1313 = vunpack.c.l.b16 %v1274
        %v1314 = vunpack.c.l.b16 %v1275
        %v1315 = vunpack.c.l.b16 %v1276
        %v1316 = vpack.c.b16 %v1301, %v1300
        %v1317 = vpack.c.b16 %v1303, %v1302
        %v1318 = vpack.c.b16 %v1305, %v1304
        %v1319 = vpack.c.b16 %v1307, %v1306
        %v1320 = vpack.c.b16 %v1309, %v1308
        %v1321 = vpack.c.b16 %v1311, %v1310
        %v1322 = vpack.c.b16 %v1313, %v1312
        %v1323 = vpack.c.b16 %v1315, %v1314
        %1332 = vmatprep.subr.bf16.mxu0 0
        %1333 = vmatpush1.bf16.msra.mxu0 %v1323
        %1334 = vmatprep.subr.bf16.mxu0 0
        %1335 = vmatpush1.bf16.msra.mxu0 %v1322
        %1336 = vmatprep.subr.bf16.mxu0 0
        %1337 = vmatpush1.bf16.msra.mxu0 %v1321
        %1338 = vmatprep.subr.bf16.mxu0 0
        %1339 = vmatpush1.bf16.msra.mxu0 %v1320
        %1340 = vmatprep.subr.bf16.mxu0 0
        %1341 = vmatpush1.bf16.msra.mxu0 %v1319
        %1342 = vmatprep.subr.bf16.mxu0 0
        %1343 = vmatpush1.bf16.msra.mxu0 %v1318
        %1344 = vmatprep.subr.bf16.mxu0 0
        %1345 = vmatpush1.bf16.msra.mxu0 %v1317
        %1346 = vmatprep.subr.bf16.mxu0 0
        %1347 = vmatpush1.bf16.msra.mxu0 %v1316
        %1348 = vmatprep.subr.bf16.mxu0 0
        %1349 = vmatpush2.bf16.msra.mxu0 0
        %1350 = vmatprep.subr.bf16.mxu0 0
        %1351 = vmatpush2.bf16.msra.mxu0 0
        %1352 = vmatprep.subr.bf16.mxu0 0
        %1353 = vmatpush2.bf16.msra.mxu0 0
        %1354 = vmatprep.subr.bf16.mxu0 0
        %1355 = vmatpush2.bf16.msra.mxu0 0
        %1356 = vmatprep.subr.bf16.mxu0 0
        %1357 = vmatpush2.bf16.msra.mxu0 0
        %1358 = vmatprep.subr.bf16.mxu0 0
        %1359 = vmatpush2.bf16.msra.mxu0 0
        %1360 = vmatprep.subr.bf16.mxu0 0
        %1361 = vmatpush2.bf16.msra.mxu0 0
        %1362 = vmatprep.subr.bf16.mxu0 0
        %1363 = vmatpush2.bf16.msra.mxu0 0
        %1364 = vmatprep.mubr.bf16.mxu0 0
        %1365 = vmatmul.mubr.bf16.gmra.mxu0 %v1260
        %v1366 = vpop.f32.mrf.mxu0
        %v1367 = vadd.f32 %v1282, %v1366
        %v1368 = vpop.f32.mrf.mxu0
        %v1369 = vpop.f32.mrf.mxu0
        %v1370 = vpop.f32.mrf.mxu0
        %1371 = vdwg.mxu0
        %v1372 = vxor.u32 %v1367, 2147483648
        %v1373 = vmul.f32 %v1372, 1.442695
        %v1374 = vpow.pop %v1373
        %v1375 = vadd.f32 %v1374, 1.0
        %v1376 = vrcp.pop %v1375
        %v1377 = vmul.f32 1.0, %v1376
        %v1378 = vmul.f32 %v1367, %v1377
        %v1379 = vpack.c.bf16 %v1378, %v1378
        %v1380 = vld [vmem:[%s775] sm:$0xf]
        %v1381 = vld [vmem:[%s775 + $0x4] sm:$0xf]
        %v1382 = vld [vmem:[%s775 + $0x8] sm:$0xf]
        %v1383 = vld [vmem:[%s775 + $0xc] sm:$0xf]
        %v1384 = vld [vmem:[%s775 + $0x10] sm:$0xf]
        %v1385 = vld [vmem:[%s775 + $0x14] sm:$0xf]
        %v1386 = vld [vmem:[%s775 + $0x18] sm:$0xf]
        %v1387 = vld [vmem:[%s775 + $0x1c] sm:$0xf]
        %v1388 = vld [vmem:[%s775 + $0x20] sm:$0xf]
        %v1389 = vld [vmem:[%s775 + $0x24] sm:$0xf]
        %v1390 = vld [vmem:[%s775 + $0x28] sm:$0xf]
        %v1391 = vld [vmem:[%s775 + $0x2c] sm:$0xf]
        %v1392 = vld [vmem:[%s775 + $0x30] sm:$0xf]
        %v1393 = vld [vmem:[%s775 + $0x34] sm:$0xf]
        %v1394 = vld [vmem:[%s775 + $0x38] sm:$0xf]
        %v1395 = vld [vmem:[%s775 + $0x3c] sm:$0xf]
        %v1396 = vld [vmem:[%s898] sm:$0x1]
        %v1398 = vlaneseq
        %v1399 = vshrl.u32 %v1398, 7
        %v1400 = vsub.s32 0, %v1399
        %v1401 = vrot.slane %v1396, %v1400
        %v1419 = vunpack.c.l.b16 %v1380
        %v1420 = vunpack.c.l.b16 %v1381
        %v1421 = vunpack.c.l.b16 %v1382
        %v1422 = vunpack.c.l.b16 %v1383
        %v1423 = vunpack.c.l.b16 %v1384
        %v1424 = vunpack.c.l.b16 %v1385
        %v1425 = vunpack.c.l.b16 %v1386
        %v1426 = vunpack.c.l.b16 %v1387
        %v1427 = vunpack.c.l.b16 %v1388
        %v1428 = vunpack.c.l.b16 %v1389
        %v1429 = vunpack.c.l.b16 %v1390
        %v1430 = vunpack.c.l.b16 %v1391
        %v1431 = vunpack.c.l.b16 %v1392
        %v1432 = vunpack.c.l.b16 %v1393
        %v1433 = vunpack.c.l.b16 %v1394
        %v1434 = vunpack.c.l.b16 %v1395
        %v1435 = vpack.c.b16 %v1420, %v1419
        %v1436 = vpack.c.b16 %v1422, %v1421
        %v1437 = vpack.c.b16 %v1424, %v1423
        %v1438 = vpack.c.b16 %v1426, %v1425
        %v1439 = vpack.c.b16 %v1428, %v1427
        %v1440 = vpack.c.b16 %v1430, %v1429
        %v1441 = vpack.c.b16 %v1432, %v1431
        %v1442 = vpack.c.b16 %v1434, %v1433
        %1451 = vmatprep.subr.bf16.mxu0 0
        %1452 = vmatpush1.bf16.msra.mxu0 %v1442
        %1453 = vmatprep.subr.bf16.mxu0 0
        %1454 = vmatpush1.bf16.msra.mxu0 %v1441
        %1455 = vmatprep.subr.bf16.mxu0 0
        %1456 = vmatpush1.bf16.msra.mxu0 %v1440
        %1457 = vmatprep.subr.bf16.mxu0 0
        %1458 = vmatpush1.bf16.msra.mxu0 %v1439
        %1459 = vmatprep.subr.bf16.mxu0 0
        %1460 = vmatpush1.bf16.msra.mxu0 %v1438
        %1461 = vmatprep.subr.bf16.mxu0 0
        %1462 = vmatpush1.bf16.msra.mxu0 %v1437
        %1463 = vmatprep.subr.bf16.mxu0 0
        %1464 = vmatpush1.bf16.msra.mxu0 %v1436
        %1465 = vmatprep.subr.bf16.mxu0 0
        %1466 = vmatpush1.bf16.msra.mxu0 %v1435
        %1467 = vmatprep.subr.bf16.mxu0 0
        %1468 = vmatpush2.bf16.msra.mxu0 0
        %1469 = vmatprep.subr.bf16.mxu0 0
        %1470 = vmatpush2.bf16.msra.mxu0 0
        %1471 = vmatprep.subr.bf16.mxu0 0
        %1472 = vmatpush2.bf16.msra.mxu0 0
        %1473 = vmatprep.subr.bf16.mxu0 0
        %1474 = vmatpush2.bf16.msra.mxu0 0
        %1475 = vmatprep.subr.bf16.mxu0 0
        %1476 = vmatpush2.bf16.msra.mxu0 0
        %1477 = vmatprep.subr.bf16.mxu0 0
        %1478 = vmatpush2.bf16.msra.mxu0 0
        %1479 = vmatprep.subr.bf16.mxu0 0
        %1480 = vmatpush2.bf16.msra.mxu0 0
        %1481 = vmatprep.subr.bf16.mxu0 0
        %1482 = vmatpush2.bf16.msra.mxu0 0
        %1483 = vmatprep.mubr.bf16.mxu0 0
        %1484 = vmatmul.mubr.bf16.gmra.mxu0 %v1379
        %v1485 = vpop.f32.mrf.mxu0
        %v1486 = vadd.f32 %v1401, %v1485
        %v1487 = vpop.f32.mrf.mxu0
        %v1488 = vpop.f32.mrf.mxu0
        %v1489 = vpop.f32.mrf.mxu0
        %1490 = vdwg.mxu0
        %v1491 = vld [vmem:[%s784] sm:$0xf]
        %v1492 = vld [vmem:[%s784 + $0x4] sm:$0xf]
        %v1493 = vld [vmem:[%s784 + $0x8] sm:$0xf]
        %v1494 = vld [vmem:[%s784 + $0xc] sm:$0xf]
        %v1495 = vld [vmem:[%s784 + $0x10] sm:$0xf]
        %v1496 = vld [vmem:[%s784 + $0x14] sm:$0xf]
        %v1497 = vld [vmem:[%s784 + $0x18] sm:$0xf]
        %v1498 = vld [vmem:[%s784 + $0x1c] sm:$0xf]
        %v1499 = vld [vmem:[%s784 + $0x20] sm:$0xf]
        %v1500 = vld [vmem:[%s784 + $0x24] sm:$0xf]
        %v1501 = vld [vmem:[%s784 + $0x28] sm:$0xf]
        %v1502 = vld [vmem:[%s784 + $0x2c] sm:$0xf]
        %v1503 = vld [vmem:[%s784 + $0x30] sm:$0xf]
        %v1504 = vld [vmem:[%s784 + $0x34] sm:$0xf]
        %v1505 = vld [vmem:[%s784 + $0x38] sm:$0xf]
        %v1506 = vld [vmem:[%s784 + $0x3c] sm:$0xf]
        %v1507 = vld [vmem:[%s901] sm:$0x1]
        %v1509 = vlaneseq
        %v1510 = vshrl.u32 %v1509, 7
        %v1511 = vsub.s32 0, %v1510
        %v1512 = vrot.slane %v1507, %v1511
        %v1530 = vunpack.c.l.b16 %v1491
        %v1531 = vunpack.c.l.b16 %v1492
        %v1532 = vunpack.c.l.b16 %v1493
        %v1533 = vunpack.c.l.b16 %v1494
        %v1534 = vunpack.c.l.b16 %v1495
        %v1535 = vunpack.c.l.b16 %v1496
        %v1536 = vunpack.c.l.b16 %v1497
        %v1537 = vunpack.c.l.b16 %v1498
        %v1538 = vunpack.c.l.b16 %v1499
        %v1539 = vunpack.c.l.b16 %v1500
        %v1540 = vunpack.c.l.b16 %v1501
        %v1541 = vunpack.c.l.b16 %v1502
        %v1542 = vunpack.c.l.b16 %v1503
        %v1543 = vunpack.c.l.b16 %v1504
        %v1544 = vunpack.c.l.b16 %v1505
        %v1545 = vunpack.c.l.b16 %v1506
        %v1546 = vpack.c.b16 %v1531, %v1530
        %v1547 = vpack.c.b16 %v1533, %v1532
        %v1548 = vpack.c.b16 %v1535, %v1534
        %v1549 = vpack.c.b16 %v1537, %v1536
        %v1550 = vpack.c.b16 %v1539, %v1538
        %v1551 = vpack.c.b16 %v1541, %v1540
        %v1552 = vpack.c.b16 %v1543, %v1542
        %v1553 = vpack.c.b16 %v1545, %v1544
        %1562 = vmatprep.subr.bf16.mxu0 0
        %1563 = vmatpush1.bf16.msra.mxu0 %v1553
        %1564 = vmatprep.subr.bf16.mxu0 0
        %1565 = vmatpush1.bf16.msra.mxu0 %v1552
        %1566 = vmatprep.subr.bf16.mxu0 0
        %1567 = vmatpush1.bf16.msra.mxu0 %v1551
        %1568 = vmatprep.subr.bf16.mxu0 0
        %1569 = vmatpush1.bf16.msra.mxu0 %v1550
        %1570 = vmatprep.subr.bf16.mxu0 0
        %1571 = vmatpush1.bf16.msra.mxu0 %v1549
        %1572 = vmatprep.subr.bf16.mxu0 0
        %1573 = vmatpush1.bf16.msra.mxu0 %v1548
        %1574 = vmatprep.subr.bf16.mxu0 0
        %1575 = vmatpush1.bf16.msra.mxu0 %v1547
        %1576 = vmatprep.subr.bf16.mxu0 0
        %1577 = vmatpush1.bf16.msra.mxu0 %v1546
        %1578 = vmatprep.subr.bf16.mxu0 0
        %1579 = vmatpush2.bf16.msra.mxu0 0
        %1580 = vmatprep.subr.bf16.mxu0 0
        %1581 = vmatpush2.bf16.msra.mxu0 0
        %1582 = vmatprep.subr.bf16.mxu0 0
        %1583 = vmatpush2.bf16.msra.mxu0 0
        %1584 = vmatprep.subr.bf16.mxu0 0
        %1585 = vmatpush2.bf16.msra.mxu0 0
        %1586 = vmatprep.subr.bf16.mxu0 0
        %1587 = vmatpush2.bf16.msra.mxu0 0
        %1588 = vmatprep.subr.bf16.mxu0 0
        %1589 = vmatpush2.bf16.msra.mxu0 0
        %1590 = vmatprep.subr.bf16.mxu0 0
        %1591 = vmatpush2.bf16.msra.mxu0 0
        %1592 = vmatprep.subr.bf16.mxu0 0
        %1593 = vmatpush2.bf16.msra.mxu0 0
        %1594 = vmatprep.mubr.bf16.mxu0 0
        %1595 = vmatmul.mubr.bf16.gmra.mxu0 %v1379
        %v1596 = vpop.f32.mrf.mxu0
        %v1597 = vadd.f32 %v1512, %v1596
        %v1598 = vpop.f32.mrf.mxu0
        %v1599 = vpop.f32.mrf.mxu0
        %v1600 = vpop.f32.mrf.mxu0
        %1601 = vdwg.mxu0
        %v1602 = vld [vmem:[%s13] sm:$0x1]
        %v1603 = vld [vmem:[%s14] sm:$0x1]
        %v1605 = vlaneseq
        %v1606 = vshrl.u32 %v1605, 7
        %v1607 = vsub.s32 0, %v1606
        %v1608 = vrot.slane %v1602, %v1607
        %v1610 = vsub.f32 %v1608, %v1597
        %v1611 = vmax.f32 %v1610, 0.0
        %vm1612 = vcmp.ne.f32.partialorder %v1610, %v1610
        %v1613 = vadd.f32 %v1610, 0.0
        %v1614 = vand.u32 2147483647, %v1610
        %v1615 = vsub.f32 0.0, %v1614
        %v1616 = vmul.f32 %v1615, 1.442695
        %v1617 = vpow.pop %v1616
        %v1618 = vadd.f32 %v1617, 1.0
        %v1619 = vlog2.pop %v1618
        %v1620 = vmul.f32 %v1619, 0.6931472
        %v1621 = vmul.f32 -0.5, %v1617
        %v1622 = vadd.f32 %v1621, 1.0
        %v1623 = vmul.f32 %v1622, %v1617
        %v1624 = vand.u32 2147483647, %v1617
        %vm1625 = vcmp.lt.f32.partialorder %v1624, 0.0004427343
        %v1626 = vsel %vm1625, %v1623, %v1620
        %v1627 = vadd.f32 %v1611, %v1626
        %v1628 = vsel %vm1612, %v1613, %v1627
        %v1629 = vsub.f32 %v1608, %v1628
        %v1631 = vlaneseq
        %v1632 = vshrl.u32 %v1631, 7
        %v1633 = vsub.s32 0, %v1632
        %v1634 = vrot.slane %v1603, %v1633
        %v1636 = vsub.f32 %v1629, %v1634
        %v1637 = vmax.f32 %v1636, 0.0
        %vm1638 = vcmp.ne.f32.partialorder %v1636, %v1636
        %v1639 = vadd.f32 %v1636, 0.0
        %v1640 = vand.u32 2147483647, %v1636
        %v1641 = vsub.f32 0.0, %v1640
        %v1642 = vmul.f32 %v1641, 1.442695
        %v1643 = vpow.pop %v1642
        %v1644 = vadd.f32 %v1643, 1.0
        %v1645 = vlog2.pop %v1644
        %v1646 = vmul.f32 %v1645, 0.6931472
        %v1647 = vmul.f32 -0.5, %v1643
        %v1648 = vadd.f32 %v1647, 1.0
        %v1649 = vmul.f32 %v1648, %v1643
        %v1650 = vand.u32 2147483647, %v1643
        %vm1651 = vcmp.lt.f32.partialorder %v1650, 0.0004427343
        %v1652 = vsel %vm1651, %v1649, %v1646
        %v1653 = vadd.f32 %v1637, %v1652
        %v1654 = vsel %vm1638, %v1639, %v1653
        %v1655 = vadd.f32 %v1634, %v1654
        %1656 = vst [vmem:[%s879] sm:$0xff] %v1486
        %v1657 = vmul.f32 %v1655, 1.442695
        %v1658 = vpow.pop %v1657
        %1659 = vst [vmem:[%s886] sm:$0xff] %v1658
        %s1660 = sand.u32 %s453, 1
        %s1661 = scalar_lea.sflag [#allocation4], %s1660
        %s1662 = sand.u32 %s453, 1
        %s1663 = smul.addr %s1662, 8
        %s1664 = scalar_lea.vmem [#allocation16], %s1663
        %s1665 = sand.u32 %s481, 1
        %s1666 = scalar_lea.sflag [#allocation18], %s1665
        %s1667 = sand.u32 %s481, 1
        %s1668 = smul.addr %s1667, 8
        %s1669 = scalar_lea.vmem [#allocation17], %s1668
        // Predicated region
        $region113: #{tpu_custom_call.1} parent=79 // pred_check
          %p1670 = pneg %p463
        $region114: #{tpu_custom_call.1} parent=79 // pred_check_branch
          %1672 = sbr.rel (%p1670) target = $region116
        $region115: #{tpu_custom_call.1} parent=79 // pred_region
          %s1674 = ssub.s32 128, 128
          %1675 = vsyncadd %s1661, %s1674
          %s1676 = sadd.s32 %s54, %s53
          %s1677 = smul.addr %s1676, 128
          %s1678 = scalar_lea.hbm %s15, %s1677
          %s1680 = sshll.u32 %s1664, 4
          %s1681 = int_to_ptr.vmem [resolvable:$true] %s1680
          %1683 = dma.vmem_to_hbm [thread:$0]  %s1681, 128, %s1678, %s1661
        $region116: #{tpu_custom_call.1} parent=79 // pred_fallthru
          _
        // Predicated region
        $region117: #{tpu_custom_call.1} parent=79 // pred_check
          %p1684 = pneg %p491
        $region118: #{tpu_custom_call.1} parent=79 // pred_check_branch
          %1686 = sbr.rel (%p1684) target = $region120
        $region119: #{tpu_custom_call.1} parent=79 // pred_region
          %s1688 = ssub.s32 128, 128
          %1689 = vsyncadd %s1666, %s1688
          %s1690 = sadd.s32 %s54, %s53
          %s1691 = smul.addr %s1690, 128
          %s1692 = scalar_lea.hbm %s16, %s1691
          %s1694 = sshll.u32 %s1669, 4
          %s1695 = int_to_ptr.vmem [resolvable:$true] %s1694
          %1697 = dma.vmem_to_hbm [thread:$0]  %s1695, 128, %s1692, %s1666
        $region120: #{tpu_custom_call.1} parent=79 // pred_fallthru
          _
      $region80: #{tpu_custom_call.1} parent=5 // pred_fallthru
        _
      %p1698 = scmp.le.s32.totalorder 2, %s44
      // Predicated region
      $region121: #{tpu_custom_call.1} parent=5 // pred_check
        %p1699 = pneg %p1698
      $region122: #{tpu_custom_call.1} parent=5 // pred_check_branch
        %1701 = sbr.rel (%p1699) target = $region124
      $region123: #{tpu_custom_call.1} parent=5 // pred_region
        %s1702 = ssub.s32 %s44, 2
        // Predicated region
        $region125: #{tpu_custom_call.1} parent=123 // pred_check
          %p1703 = pneg %p469
        $region126: #{tpu_custom_call.1} parent=123 // pred_check_branch
          %1705 = sbr.rel (%p1703) target = $region128
        $region127: #{tpu_custom_call.1} parent=123 // pred_region
          %s1706 = sand.u32 %s454, 1
          %s1707 = scalar_lea.sflag [#allocation4], %s1706
          %s1708 = sand.u32 %s454, 1
          %s1709 = smul.addr %s1708, 8
          %s1710 = scalar_lea.vmem [#allocation16], %s1709
          %1711 = dma.done %s1707, 128
        $region128: #{tpu_custom_call.1} parent=123 // pred_fallthru
          _
        // Predicated region
        $region129: #{tpu_custom_call.1} parent=123 // pred_check
          %p1712 = pneg %p497
        $region130: #{tpu_custom_call.1} parent=123 // pred_check_branch
          %1714 = sbr.rel (%p1712) target = $region132
        $region131: #{tpu_custom_call.1} parent=123 // pred_region
          %s1715 = sand.u32 %s482, 1
          %s1716 = scalar_lea.sflag [#allocation18], %s1715
          %s1717 = sand.u32 %s482, 1
          %s1718 = smul.addr %s1717, 8
          %s1719 = scalar_lea.vmem [#allocation17], %s1718
          %1720 = dma.done %s1716, 128
        $region132: #{tpu_custom_call.1} parent=123 // pred_fallthru
          _
      $region124: #{tpu_custom_call.1} parent=5 // pred_fallthru
        _
    $region6: #{tpu_custom_call.1} parent=1 // loop_footer
      %s48 = sadd.s32 1, %s44
    $region7: #{tpu_custom_call.1} parent=1 // loop_footer_branch
      %43 = sbr.rel target = $region3
    $region8: #{tpu_custom_call.1} parent=1 // loop_exit
      _
    %1721 = vsyncpa [#allocation3], 1
    %s1722 = scalar_lea.sflag [#allocation3], 1
    %1723 = vsyncpa %s1722, 1
    %1724 = vsyncpa [#allocation6], 1
    %s1725 = scalar_lea.sflag [#allocation6], 1
    %1726 = vsyncpa %s1725, 1
    %1727 = vsyncpa [#allocation9], 1
    %s1728 = scalar_lea.sflag [#allocation9], 1
    %1729 = vsyncpa %s1728, 1
    %1730 = vsyncpa [#allocation12], 1
    %s1731 = scalar_lea.sflag [#allocation12], 1
    %1732 = vsyncpa %s1731, 1
    %1733 = vsyncpa [#allocation15], 1
    %s1734 = scalar_lea.sflag [#allocation15], 1
    %1735 = vsyncpa %s1734, 1
    %1736 = vsyncpa [#allocation4], 1
    %s1737 = scalar_lea.sflag [#allocation4], 1
    %1738 = vsyncpa %s1737, 1
    %1739 = vsyncpa [#allocation18], 1
    %s1740 = scalar_lea.sflag [#allocation18], 1
    %1741 = vsyncpa %s1740, 1

</llo_original>
